<compile_context>
chip_gen: v5e
topology: v5e:2x2
jax: 0.10.0
libtpu: 0.0.40
codegen_flags: <defaults>
</compile_context>

<pallas_src>
import functools

import jax
import jax.numpy as jnp
from jax import lax
from jax.experimental import pallas as pl
from jax.experimental.pallas import tpu as pltpu


# ----------------------------------------------------------------------------
# helpers
# ----------------------------------------------------------------------------
def _round_up(x, m):
    return ((x + m - 1) // m) * m


def _vmem_capacity_bytes():
    try:
        info = pltpu.get_tpu_info()
        cap = getattr(info, "vmem_capacity_bytes", None)
        if cap:
            return int(cap)
    except Exception:
        pass
    return 64 * 2**20   # conservative default (v7x per-core VMEM)


_VMEM_CAP = _vmem_capacity_bytes()


def _choose_time_chunk(T, Bp, E, Hp, io_bytes, budget_bytes, max_chunk):
    """Largest chunk (<= max_chunk, <= T) whose double-buffered x/out blocks plus
    the f32 gi scratch fit the budget.  T is padded to a multiple of the chunk
    (tail masked in-kernel), so no divisor constraint / Tt=1 fallback."""
    per_step = Bp * (2 * (E + Hp) * io_bytes + 3 * Hp * 4)
    cap = max(1, budget_bytes // max(per_step, 1))
    return int(max(1, min(T, max_chunk, cap)))


# ----------------------------------------------------------------------------
# Pallas kernel: one GRU direction per grid row, time-chunked along grid cols
# ----------------------------------------------------------------------------
def _bigru_dir_kernel(x_ref,      # [Tt*Bp, E]    io_dtype  (chunk, already dir-ordered)
                      wih_ref,    # [1, E,  3Hp]  f32       (this direction)
                      bih_ref,    # [1, 1,  3Hp]  f32
                      whh_ref,    # [1, Hp, 3Hp]  f32
                      bhh_ref,    # [1, 1,  3Hp]  f32
                      out_ref,    # [Tt*Bp, Hp]   io_dtype  (column block d of out)
                      hfin_ref,   # [1, Bp, Hp]   f32       final state, this direction
                      h_scr,      # VMEM [Bp, Hp] f32       state, persists across chunks
                      gi_scr,     # VMEM [Tt*Bp, 3Hp] f32   per-chunk input projection
                      *, t_valid, t_padded):
    d = pl.program_id(0)                 # 0 = forward, 1 = backward
    c = pl.program_id(1)                 # chunk index along (padded) time
    nc = pl.num_programs(1)
    Bp, Hp = h_scr.shape
    Tt = out_ref.shape[0] // Bp
    G = 3 * Hp

    @pl.when(c == 0)
    def _init():
        h_scr[...] = jnp.zeros_like(h_scr)

    # ---- fused input projection for the whole chunk: ONE MXU dot ----
    x2d = x_ref[...].astype(jnp.float32)                            # [Tt*Bp, E]
    gi_scr[...] = (jnp.dot(x2d, wih_ref[0],
                           preferred_element_type=jnp.float32)
                   + bih_ref[0])                                    # [Tt*Bp, 3Hp]

    # Hoist loop-invariant loads / broadcasts out of the time loop.
    whh = whh_ref[0]                                                # [Hp, 3Hp]
    bhh = jnp.broadcast_to(bhh_ref[0], (Bp, G))

    # Original chunk index along time (backward direction visits chunks reversed).
    c_orig = c + d * (nc - 1 - 2 * c)
    t_base = c_orig * Tt

    def step(i, h):
        li = i + d * (Tt - 1 - 2 * i)        # local time idx: fwd i, bwd Tt-1-i
        row0 = pl.multiple_of(li * Bp, Bp)
        gi = gi_scr[pl.ds(row0, Bp), :]                             # [Bp, 3Hp]

        gh = jnp.dot(h, whh, preferred_element_type=jnp.float32) + bhh

        # PyTorch gate order (r, z, n); all slices are 128-lane aligned.
        r = jax.nn.sigmoid(gi[:, 0:Hp] + gh[:, 0:Hp])
        z = jax.nn.sigmoid(gi[:, Hp:2 * Hp] + gh[:, Hp:2 * Hp])
        n = jnp.tanh(gi[:, 2 * Hp:G] + r * gh[:, 2 * Hp:G])
        h_new = (1.0 - z) * n + z * h

        if t_padded != t_valid:              # static: only when a padded tail exists
            keep = (t_base + li < t_valid).astype(jnp.float32)
            h_new = keep * h_new + (1.0 - keep) * h

        out_ref[pl.ds(row0, Bp), :] = h_new.astype(out_ref.dtype)
        return h_new

    unroll = True if Tt <= 16 else 4
    h_last = lax.fori_loop(0, Tt, step, h_scr[...], unroll=unroll)

    h_scr[...] = h_last        # persist recurrence state across time chunks
    hfin_ref[0] = h_last       # final state of this direction (last write wins)


# ----------------------------------------------------------------------------
# One-time parameter packing (outside the per-call path)
# ----------------------------------------------------------------------------
def pack_params(params, enc_hid_dim):
    H = enc_hid_dim
    Hp = _round_up(H, 128)

    def pad_gates(w):                       # [R, 3H] -> [R, 3Hp], 128-aligned gates
        R = w.shape[0]
        out = jnp.zeros((R, 3 * Hp), jnp.float32)
        for g in range(3):
            out = out.at[:, g * Hp:g * Hp + H].set(w[:, g * H:(g + 1) * H])
        return out

    def pad_rows(w, Rp):
        return jnp.pad(w, ((0, Rp - w.shape[0]), (0, 0)))

    wih = jnp.stack([pad_gates(params["wih_f"]), pad_gates(params["wih_b"])])    # [2,E,3Hp]
    bih = jnp.stack([pad_gates(params["bih_f"]), pad_gates(params["bih_b"])])    # [2,1,3Hp]
    whh = jnp.stack([pad_rows(pad_gates(params["whh_f"]), Hp),
                     pad_rows(pad_gates(params["whh_b"]), Hp)])                  # [2,Hp,3Hp]
    bhh = jnp.stack([pad_gates(params["bhh_f"]), pad_gates(params["bhh_b"])])    # [2,1,3Hp]
    return {"emb": params["emb"], "wih": wih, "bih": bih, "whh": whh, "bhh": bhh,
            "wfc": params["wfc"], "bfc": params["bfc"]}


# ----------------------------------------------------------------------------
# Wrapper
# ----------------------------------------------------------------------------
@functools.partial(jax.jit, static_argnames=("enc_hid_dim", "dec_hid_dim",
                                             "io_dtype", "max_time_chunk"))
def attn_encoder_forward(src, packed, *, enc_hid_dim, dec_hid_dim,
                         io_dtype=jnp.float32, max_time_chunk=128):
    """src: [T, B] int32 token ids.  Returns (outputs [T,B,2H] f32, hidden [B,D] f32)."""
    T, B = src.shape
    H, D = enc_hid_dim, dec_hid_dim
    E = packed["wih"].shape[1]
    Hp = packed["wih"].shape[2] // 3

    io_b = 2 if io_dtype in (jnp.bfloat16, jnp.float16) else 4
    sub = 16 if io_b == 2 else 8           # sublane alignment for the io dtype
    Bp = _round_up(max(B, sub), sub)

    # ---- time chunking (no divisor constraint; tail zero-padded + masked) ----
    chunk_budget = min(24 << 20, _VMEM_CAP // 4)
    Tt = _choose_time_chunk(T, Bp, E, Hp, io_b, chunk_budget, max_time_chunk)
    nc = (T + Tt - 1) // Tt
    Tp = nc * Tt

    # Embedding lookup (gather) + eval-mode dropout (identity) in XLA glue.
    x = jnp.take(packed["emb"], src, axis=0).astype(io_dtype)       # [T, B, E]
    x = jnp.pad(x, ((0, Tp - T), (0, Bp - B), (0, 0)))               # [Tp, Bp, E]
    x2d = x.reshape(Tp * Bp, E)                                      # lane-dense 2-D

    # ---- VMEM estimate -> limit ----
    w_blk = 4 * (E * 3 * Hp + 3 * Hp + Hp * 3 * Hp + 3 * Hp)         # one direction
    est = (2 * Tt * Bp * E * io_b            # x chunk (double-buffered)
           + 2 * Tt * Bp * Hp * io_b         # out chunk
           + 2 * Bp * Hp * 4                 # hfin block
           + 2 * w_blk                       # resident weights (double-buffered)
           + Tt * Bp * 3 * Hp * 4            # gi scratch
           + Bp * Hp * 4)                    # state scratch
    vmem_limit = int(min(max(2 * est, 32 << 20), int(0.72 * _VMEM_CAP)))
    vmem_limit = int(min(max(vmem_limit, est + (4 << 20)), int(0.9 * _VMEM_CAP)))

    def chunk_idx(dd, cc):                   # original time-chunk for (direction, step)
        return cc + dd * (nc - 1 - 2 * cc)

    out2d, hfin = pl.pallas_call(
        functools.partial(_bigru_dir_kernel, t_valid=T, t_padded=Tp),
        grid=(2, nc),
        in_specs=[
            pl.BlockSpec((Tt * Bp, E), lambda d, c: (chunk_idx(d, c), 0)),     # x chunk
            pl.BlockSpec((1, E, 3 * Hp), lambda d, c: (d, 0, 0)),              # wih (dir)
            pl.BlockSpec((1, 1, 3 * Hp), lambda d, c: (d, 0, 0)),              # bih
            pl.BlockSpec((1, Hp, 3 * Hp), lambda d, c: (d, 0, 0)),             # whh
            pl.BlockSpec((1, 1, 3 * Hp), lambda d, c: (d, 0, 0)),              # bhh
        ],
        out_specs=(
            pl.BlockSpec((Tt * Bp, Hp), lambda d, c: (chunk_idx(d, c), d)),    # outputs
            pl.BlockSpec((1, Bp, Hp), lambda d, c: (d, 0, 0)),                 # final h
        ),
        out_shape=(
            jax.ShapeDtypeStruct((Tp * Bp, 2 * Hp), io_dtype),
            jax.ShapeDtypeStruct((2, Bp, Hp), jnp.float32),
        ),
        scratch_shapes=[
            pltpu.VMEM((Bp, Hp), jnp.float32),            # recurrence state
            pltpu.VMEM((Tt * Bp, 3 * Hp), jnp.float32),   # per-chunk gi
        ],
        compiler_params=pltpu.CompilerParams(
            dimension_semantics=("parallel", "arbitrary"),   # dirs on both v7x cores
            vmem_limit_bytes=vmem_limit,
        ),
    )(x2d, packed["wih"], packed["bih"], packed["whh"], packed["bhh"])

    # ---- strip padding; rebuild PyTorch layouts in XLA glue ----
    out3 = out2d.reshape(Tp, Bp, 2 * Hp)
    if Hp == H:
        outputs = out3[:T, :B, :].astype(jnp.float32)
    else:
        outputs = jnp.concatenate(
            [out3[:T, :B, :H], out3[:T, :B, Hp:Hp + H]], axis=-1).astype(jnp.float32)

    # Tiny tanh(fc) epilogue on the exact f32 final states (moved out of kernel).
    h_f = hfin[0, :B, :H]
    h_b = hfin[1, :B, :H]
    hidden = jnp.tanh(
        jnp.concatenate([h_f, h_b], axis=-1) @ packed["wfc"] + packed["bfc"])
    return outputs, hidden


# ----------------------------------------------------------------------------
# Deterministic parameter init (shapes follow the PyTorch module)
# ----------------------------------------------------------------------------
def init_params(key, input_dim, emb_dim, enc_hid_dim, dec_hid_dim):
    H = enc_hid_dim
    ks = jax.random.split(key, 12)
    k = 1.0 / jnp.sqrt(H)

    def u(key, shape, bound):
        return jax.random.uniform(key, shape, jnp.float32, -bound, bound)

    return {
        "emb":   jax.random.normal(ks[0], (input_dim, emb_dim), jnp.float32),
        # GRU weights stored pre-transposed: x @ W_ih^T == x @ wih
        "wih_f": u(ks[1], (emb_dim, 3 * H), k),
        "whh_f": u(ks[2], (H, 3 * H), k),
        "bih_f": u(ks[3], (1, 3 * H), k),
        "bhh_f": u(ks[4], (1, 3 * H), k),
        "wih_b": u(ks[5], (emb_dim, 3 * H), k),
        "whh_b": u(ks[6], (H, 3 * H), k),
        "bih_b": u(ks[7], (1, 3 * H), k),
        "bhh_b": u(ks[8], (1, 3 * H), k),
        # fc: Linear(2H -> D), stored as [2H, D]
        "wfc":   u(ks[9], (2 * H, dec_hid_dim), 1.0 / jnp.sqrt(2 * H)),
        "bfc":   u(ks[10], (1, dec_hid_dim), 1.0 / jnp.sqrt(2 * H)),
    }


# ----------------------------------------------------------------------------
# Pure-JAX reference (same semantics as the PyTorch forward in eval mode)
# ----------------------------------------------------------------------------
def reference_forward(src, params, enc_hid_dim):
    H = enc_hid_dim
    x = jnp.take(params["emb"], src, axis=0).astype(jnp.float32)    # [T, B, E]
    B = x.shape[1]

    def make_cell(wih, whh, bih, bhh):
        def cell(h, x_t):
            gi = x_t @ wih + bih
            gh = h @ whh + bhh
            r = jax.nn.sigmoid(gi[:, 0:H] + gh[:, 0:H])
            z = jax.nn.sigmoid(gi[:, H:2 * H] + gh[:, H:2 * H])
            n = jnp.tanh(gi[:, 2 * H:] + r * gh[:, 2 * H:])
            h_new = (1.0 - z) * n + z * h
            return h_new, h_new
        return cell

    h0 = jnp.zeros((B, H), jnp.float32)
    cell_f = make_cell(params["wih_f"], params["whh_f"], params["bih_f"], params["bhh_f"])
    cell_b = make_cell(params["wih_b"], params["whh_b"], params["bih_b"], params["bhh_b"])

    hf_final, out_f = lax.scan(cell_f, h0, x)
    hb_final, out_b_rev = lax.scan(cell_b, h0, x[::-1])
    out_b = out_b_rev[::-1]

    outputs = jnp.concatenate([out_f, out_b], axis=-1)
    cat = jnp.concatenate([hf_final, hb_final], axis=-1)
    hidden = jnp.tanh(cat @ params["wfc"] + params["bfc"])
    return outputs, hidden


if __name__ == "__main__":
    INPUT_DIM = 16      # vocab size
    EMB_DIM = 16
    ENC_HID_DIM = 32
    DEC_HID_DIM = 32

    key = jax.random.PRNGKey(0)
    kp, ks1, ks2 = jax.random.split(key, 3)
    params = init_params(kp, INPUT_DIM, EMB_DIM, ENC_HID_DIM, DEC_HID_DIM)
    packed = pack_params(params, ENC_HID_DIM)   # one-time packing, outside per-call path

    # --- test 1: f32 streaming, single time chunk ---
    T, B = 8, 4
    src = jax.random.randint(ks1, (T, B), 0, INPUT_DIM, dtype=jnp.int32)
    outputs, hidden = attn_encoder_forward(
        src, packed, enc_hid_dim=ENC_HID_DIM, dec_hid_dim=DEC_HID_DIM)
    jax.block_until_ready((outputs, hidden))
    ref_out, ref_hid = reference_forward(src, params, ENC_HID_DIM)
    assert outputs.shape == (T, B, 2 * ENC_HID_DIM)
    assert hidden.shape == (B, DEC_HID_DIM)
    assert jnp.allclose(outputs, ref_out, atol=2e-4, rtol=2e-4)
    assert jnp.allclose(hidden, ref_hid, atol=2e-4, rtol=2e-4)

    # --- test 2: multi-chunk grid + tail masking (T not a multiple of Tt) ---
    T2 = 11
    src2 = jax.random.randint(ks2, (T2, B), 0, INPUT_DIM, dtype=jnp.int32)
    out2, hid2 = attn_encoder_forward(
        src2, packed, enc_hid_dim=ENC_HID_DIM, dec_hid_dim=DEC_HID_DIM,
        max_time_chunk=4)
    jax.block_until_ready((out2, hid2))
    ref_out2, ref_hid2 = reference_forward(src2, params, ENC_HID_DIM)
    assert out2.shape == (T2, B, 2 * ENC_HID_DIM)
    assert jnp.allclose(out2, ref_out2, atol=2e-4, rtol=2e-4)
    assert jnp.allclose(hid2, ref_hid2, atol=2e-4, rtol=2e-4)

    # --- test 3: bf16-streamed x / outputs (f32 compute), loose tolerance ---
    out3, hid3 = attn_encoder_forward(
        src, packed, enc_hid_dim=ENC_HID_DIM, dec_hid_dim=DEC_HID_DIM,
        io_dtype=jnp.bfloat16)
    jax.block_until_ready((out3, hid3))
    assert out3.shape == (T, B, 2 * ENC_HID_DIM)
    assert jnp.allclose(out3, ref_out, atol=6e-2, rtol=6e-2)
    assert jnp.allclose(hid3, ref_hid, atol=6e-2, rtol=6e-2)

    print("KERNEL_OK")
</pallas_src>

<mosaic_0001>
module attributes {stable_mosaic.version = 11 : i64} {
  func.func @_bigru_dir_kernel(%arg0: i32, %arg1: i32, %arg2: memref<64x16xf32, #tpu.memory_space<vmem>>, %arg3: memref<1x16x384xf32, #tpu.memory_space<vmem>>, %arg4: memref<1x1x384xf32, #tpu.memory_space<vmem>>, %arg5: memref<1x128x384xf32, #tpu.memory_space<vmem>>, %arg6: memref<1x1x384xf32, #tpu.memory_space<vmem>>, %arg7: memref<64x128xf32, #tpu.memory_space<vmem>>, %arg8: memref<1x8x128xf32, #tpu.memory_space<vmem>>, %arg9: memref<8x128xf32, #tpu.memory_space<vmem>>, %arg10: memref<64x384xf32, #tpu.memory_space<vmem>>) attributes {dimension_semantics = [#tpu.dimension_semantics<parallel>, #tpu.dimension_semantics<arbitrary>], iteration_bounds = array<i64: 2, 1>, scalar_prefetch = 0 : i64, scratch_operands = 2 : i64, tpu.core_type = #tpu.core_type<tc>, window_params = [{transform_indices = @transform_0, window_bounds = array<i64: 64, 16>}, {transform_indices = @transform_1, window_bounds = array<i64: 1, 16, 384>}, {transform_indices = @transform_2, window_bounds = array<i64: 1, 1, 384>}, {transform_indices = @transform_3, window_bounds = array<i64: 1, 128, 384>}, {transform_indices = @transform_4, window_bounds = array<i64: 1, 1, 384>}, {transform_indices = @transform_5, window_bounds = array<i64: 64, 128>}, {transform_indices = @transform_6, window_bounds = array<i64: 1, 8, 128>}]} {
    %c0_i32 = arith.constant 0 : i32
    %0 = arith.cmpi eq, %arg1, %c0_i32 : i32
    %1 = arith.extui %0 : i1 to i32
    %c0_i32_0 = arith.constant 0 : i32
    %2 = arith.cmpi ne, %1, %c0_i32_0 : i32
    scf.if %2 {
      %cst_96 = arith.constant 0.000000e+00 : f32
      %327 = vector.broadcast %cst_96 : f32 to vector<8x128xf32>
      %c0_97 = arith.constant 0 : index
      %c0_98 = arith.constant 0 : index
      %328 = vector.load %arg9[%c0_97, %c0_98] : memref<8x128xf32, #tpu.memory_space<vmem>>, vector<8x128xf32>
      tpu.vector_store %arg9[%c0_97, %c0_98], %327 {strides = array<i32>} : memref<8x128xf32, #tpu.memory_space<vmem>>, vector<8x128xf32>,
    } else {
    }
    %c0 = arith.constant 0 : index
    %c0_1 = arith.constant 0 : index
    %3 = vector.load %arg2[%c0, %c0_1] : memref<64x16xf32, #tpu.memory_space<vmem>>, vector<64x16xf32>
    %c0_2 = arith.constant 0 : index
    %c0_3 = arith.constant 0 : index
    %c0_4 = arith.constant 0 : index
    %4 = vector.load %arg3[%c0_2, %c0_3, %c0_4] : memref<1x16x384xf32, #tpu.memory_space<vmem>>, vector<1x16x384xf32>
    %5 = vector.shape_cast %4 : vector<1x16x384xf32> to vector<16x384xf32>
    %cst = arith.constant dense<0.000000e+00> : vector<64x384xf32>
    %6 = tpu.matmul %3, %5, %cst {dimension_numbers = #tpu.dot_dimension_numbers<[1], [0], [0], [1], [0, 0, 1, 1], [], []>} : vector<64x16xf32>, vector<16x384xf32>, vector<64x384xf32> -> vector<64x384xf32>
    %c0_5 = arith.constant 0 : index
    %c0_6 = arith.constant 0 : index
    %c0_7 = arith.constant 0 : index
    %7 = vector.load %arg4[%c0_5, %c0_6, %c0_7] : memref<1x1x384xf32, #tpu.memory_space<vmem>>, vector<1x1x384xf32>
    %8 = vector.shape_cast %7 : vector<1x1x384xf32> to vector<1x384xf32>
    %9 = vector.broadcast %8 : vector<1x384xf32> to vector<64x384xf32>
    %10 = arith.addf %6, %9 : vector<64x384xf32>
    %c0_8 = arith.constant 0 : index
    %c0_9 = arith.constant 0 : index
    %11 = vector.load %arg10[%c0_8, %c0_9] : memref<64x384xf32, #tpu.memory_space<vmem>>, vector<64x384xf32>
    tpu.vector_store %arg10[%c0_8, %c0_9], %10 {strides = array<i32>} : memref<64x384xf32, #tpu.memory_space<vmem>>, vector<64x384xf32>,
    %c0_10 = arith.constant 0 : index
    %c0_11 = arith.constant 0 : index
    %c0_12 = arith.constant 0 : index
    %12 = vector.load %arg5[%c0_10, %c0_11, %c0_12] : memref<1x128x384xf32, #tpu.memory_space<vmem>>, vector<1x128x384xf32>
    %13 = vector.shape_cast %12 : vector<1x128x384xf32> to vector<128x384xf32>
    %c0_13 = arith.constant 0 : index
    %c0_14 = arith.constant 0 : index
    %c0_15 = arith.constant 0 : index
    %14 = vector.load %arg6[%c0_13, %c0_14, %c0_15] : memref<1x1x384xf32, #tpu.memory_space<vmem>>, vector<1x1x384xf32>
    %15 = vector.shape_cast %14 : vector<1x1x384xf32> to vector<1x384xf32>
    %16 = vector.shape_cast %15 : vector<1x384xf32> to vector<1x384xf32>
    %17 = vector.broadcast %16 : vector<1x384xf32> to vector<8x384xf32>
    %c0_16 = arith.constant 0 : index
    %c0_17 = arith.constant 0 : index
    %18 = vector.load %arg9[%c0_16, %c0_17] : memref<8x128xf32, #tpu.memory_space<vmem>>, vector<8x128xf32>
    %c0_i32_18 = arith.constant 0 : i32
    %c2_i32 = arith.constant 2 : i32
    %19 = arith.muli %c2_i32, %c0_i32_18 : i32
    %c7_i32 = arith.constant 7 : i32
    %20 = arith.subi %c7_i32, %19 : i32
    %21 = arith.muli %arg0, %20 : i32
    %22 = arith.addi %c0_i32_18, %21 : i32
    %c8_i32 = arith.constant 8 : i32
    %23 = arith.muli %22, %c8_i32 : i32
    %24 = tpu.assume_multiple %23, 8 : i32
    %25 = arith.index_cast %24 : i32 to index
    %c0_19 = arith.constant 0 : index
    %26 = vector.load %arg10[%25, %c0_19] : memref<64x384xf32, #tpu.memory_space<vmem>>, vector<8x384xf32>
    %cst_20 = arith.constant dense<0.000000e+00> : vector<8x384xf32>
    %27 = tpu.matmul %18, %13, %cst_20 {dimension_numbers = #tpu.dot_dimension_numbers<[1], [0], [0], [1], [0, 0, 1, 1], [], []>} : vector<8x128xf32>, vector<128x384xf32>, vector<8x384xf32> -> vector<8x384xf32>
    %28 = arith.addf %27, %17 : vector<8x384xf32>
    %29 = vector.extract_strided_slice %26 {offsets = [0, 0], sizes = [8, 128], strides = [1, 1]} : vector<8x384xf32> to vector<8x128xf32>
    %30 = vector.extract_strided_slice %28 {offsets = [0, 0], sizes = [8, 128], strides = [1, 1]} : vector<8x384xf32> to vector<8x128xf32>
    %31 = arith.addf %29, %30 : vector<8x128xf32>
    %32 = arith.negf %31 : vector<8x128xf32>
    %33 = math.exp %32 : vector<8x128xf32>
    %cst_21 = arith.constant 1.000000e+00 : f32
    %34 = vector.broadcast %cst_21 : f32 to vector<8x128xf32>
    %35 = arith.addf %34, %33 : vector<8x128xf32>
    %36 = arith.divf %34, %35 : vector<8x128xf32>
    %37 = vector.extract_strided_slice %26 {offsets = [0, 128], sizes = [8, 128], strides = [1, 1]} : vector<8x384xf32> to vector<8x128xf32>
    %38 = vector.extract_strided_slice %28 {offsets = [0, 128], sizes = [8, 128], strides = [1, 1]} : vector<8x384xf32> to vector<8x128xf32>
    %39 = arith.addf %37, %38 : vector<8x128xf32>
    %40 = arith.negf %39 : vector<8x128xf32>
    %41 = math.exp %40 : vector<8x128xf32>
    %cst_22 = arith.constant 1.000000e+00 : f32
    %42 = vector.broadcast %cst_22 : f32 to vector<8x128xf32>
    %43 = arith.addf %42, %41 : vector<8x128xf32>
    %44 = arith.divf %42, %43 : vector<8x128xf32>
    %45 = vector.extract_strided_slice %26 {offsets = [0, 256], sizes = [8, 128], strides = [1, 1]} : vector<8x384xf32> to vector<8x128xf32>
    %46 = vector.extract_strided_slice %28 {offsets = [0, 256], sizes = [8, 128], strides = [1, 1]} : vector<8x384xf32> to vector<8x128xf32>
    %47 = arith.mulf %36, %46 : vector<8x128xf32>
    %48 = arith.addf %45, %47 : vector<8x128xf32>
    %49 = math.tanh %48 : vector<8x128xf32>
    %cst_23 = arith.constant 1.000000e+00 : f32
    %50 = vector.broadcast %cst_23 : f32 to vector<8x128xf32>
    %51 = arith.subf %50, %44 : vector<8x128xf32>
    %52 = arith.mulf %51, %49 : vector<8x128xf32>
    %53 = arith.mulf %44, %18 : vector<8x128xf32>
    %54 = arith.addf %52, %53 : vector<8x128xf32>
    %55 = arith.index_cast %24 : i32 to index
    %c0_24 = arith.constant 0 : index
    %56 = vector.load %arg7[%55, %c0_24] : memref<64x128xf32, #tpu.memory_space<vmem>>, vector<8x128xf32>
    tpu.vector_store %arg7[%55, %c0_24], %54 {strides = array<i32>} : memref<64x128xf32, #tpu.memory_space<vmem>>, vector<8x128xf32>,
    %c1_i32 = arith.constant 1 : i32
    %c2_i32_25 = arith.constant 2 : i32
    %57 = arith.muli %c2_i32_25, %c1_i32 : i32
    %c7_i32_26 = arith.constant 7 : i32
    %58 = arith.subi %c7_i32_26, %57 : i32
    %59 = arith.muli %arg0, %58 : i32
    %60 = arith.addi %c1_i32, %59 : i32
    %c8_i32_27 = arith.constant 8 : i32
    %61 = arith.muli %60, %c8_i32_27 : i32
    %62 = tpu.assume_multiple %61, 8 : i32
    %63 = arith.index_cast %62 : i32 to index
    %c0_28 = arith.constant 0 : index
    %64 = vector.load %arg10[%63, %c0_28] : memref<64x384xf32, #tpu.memory_space<vmem>>, vector<8x384xf32>
    %cst_29 = arith.constant dense<0.000000e+00> : vector<8x384xf32>
    %65 = tpu.matmul %54, %13, %cst_29 {dimension_numbers = #tpu.dot_dimension_numbers<[1], [0], [0], [1], [0, 0, 1, 1], [], []>} : vector<8x128xf32>, vector<128x384xf32>, vector<8x384xf32> -> vector<8x384xf32>
    %66 = arith.addf %65, %17 : vector<8x384xf32>
    %67 = vector.extract_strided_slice %64 {offsets = [0, 0], sizes = [8, 128], strides = [1, 1]} : vector<8x384xf32> to vector<8x128xf32>
    %68 = vector.extract_strided_slice %66 {offsets = [0, 0], sizes = [8, 128], strides = [1, 1]} : vector<8x384xf32> to vector<8x128xf32>
    %69 = arith.addf %67, %68 : vector<8x128xf32>
    %70 = arith.negf %69 : vector<8x128xf32>
    %71 = math.exp %70 : vector<8x128xf32>
    %cst_30 = arith.constant 1.000000e+00 : f32
    %72 = vector.broadcast %cst_30 : f32 to vector<8x128xf32>
    %73 = arith.addf %72, %71 : vector<8x128xf32>
    %74 = arith.divf %72, %73 : vector<8x128xf32>
    %75 = vector.extract_strided_slice %64 {offsets = [0, 128], sizes = [8, 128], strides = [1, 1]} : vector<8x384xf32> to vector<8x128xf32>
    %76 = vector.extract_strided_slice %66 {offsets = [0, 128], sizes = [8, 128], strides = [1, 1]} : vector<8x384xf32> to vector<8x128xf32>
    %77 = arith.addf %75, %76 : vector<8x128xf32>
    %78 = arith.negf %77 : vector<8x128xf32>
    %79 = math.exp %78 : vector<8x128xf32>
    %cst_31 = arith.constant 1.000000e+00 : f32
    %80 = vector.broadcast %cst_31 : f32 to vector<8x128xf32>
    %81 = arith.addf %80, %79 : vector<8x128xf32>
    %82 = arith.divf %80, %81 : vector<8x128xf32>
    %83 = vector.extract_strided_slice %64 {offsets = [0, 256], sizes = [8, 128], strides = [1, 1]} : vector<8x384xf32> to vector<8x128xf32>
    %84 = vector.extract_strided_slice %66 {offsets = [0, 256], sizes = [8, 128], strides = [1, 1]} : vector<8x384xf32> to vector<8x128xf32>
    %85 = arith.mulf %74, %84 : vector<8x128xf32>
    %86 = arith.addf %83, %85 : vector<8x128xf32>
    %87 = math.tanh %86 : vector<8x128xf32>
    %cst_32 = arith.constant 1.000000e+00 : f32
    %88 = vector.broadcast %cst_32 : f32 to vector<8x128xf32>
    %89 = arith.subf %88, %82 : vector<8x128xf32>
    %90 = arith.mulf %89, %87 : vector<8x128xf32>
    %91 = arith.mulf %82, %54 : vector<8x128xf32>
    %92 = arith.addf %90, %91 : vector<8x128xf32>
    %93 = arith.index_cast %62 : i32 to index
    %c0_33 = arith.constant 0 : index
    %94 = vector.load %arg7[%93, %c0_33] : memref<64x128xf32, #tpu.memory_space<vmem>>, vector<8x128xf32>
    tpu.vector_store %arg7[%93, %c0_33], %92 {strides = array<i32>} : memref<64x128xf32, #tpu.memory_space<vmem>>, vector<8x128xf32>,
    %c2_i32_34 = arith.constant 2 : i32
    %c2_i32_35 = arith.constant 2 : i32
    %95 = arith.muli %c2_i32_35, %c2_i32_34 : i32
    %c7_i32_36 = arith.constant 7 : i32
    %96 = arith.subi %c7_i32_36, %95 : i32
    %97 = arith.muli %arg0, %96 : i32
    %98 = arith.addi %c2_i32_34, %97 : i32
    %c8_i32_37 = arith.constant 8 : i32
    %99 = arith.muli %98, %c8_i32_37 : i32
    %100 = tpu.assume_multiple %99, 8 : i32
    %101 = arith.index_cast %100 : i32 to index
    %c0_38 = arith.constant 0 : index
    %102 = vector.load %arg10[%101, %c0_38] : memref<64x384xf32, #tpu.memory_space<vmem>>, vector<8x384xf32>
    %cst_39 = arith.constant dense<0.000000e+00> : vector<8x384xf32>
    %103 = tpu.matmul %92, %13, %cst_39 {dimension_numbers = #tpu.dot_dimension_numbers<[1], [0], [0], [1], [0, 0, 1, 1], [], []>} : vector<8x128xf32>, vector<128x384xf32>, vector<8x384xf32> -> vector<8x384xf32>
    %104 = arith.addf %103, %17 : vector<8x384xf32>
    %105 = vector.extract_strided_slice %102 {offsets = [0, 0], sizes = [8, 128], strides = [1, 1]} : vector<8x384xf32> to vector<8x128xf32>
    %106 = vector.extract_strided_slice %104 {offsets = [0, 0], sizes = [8, 128], strides = [1, 1]} : vector<8x384xf32> to vector<8x128xf32>
    %107 = arith.addf %105, %106 : vector<8x128xf32>
    %108 = arith.negf %107 : vector<8x128xf32>
    %109 = math.exp %108 : vector<8x128xf32>
    %cst_40 = arith.constant 1.000000e+00 : f32
    %110 = vector.broadcast %cst_40 : f32 to vector<8x128xf32>
    %111 = arith.addf %110, %109 : vector<8x128xf32>
    %112 = arith.divf %110, %111 : vector<8x128xf32>
    %113 = vector.extract_strided_slice %102 {offsets = [0, 128], sizes = [8, 128], strides = [1, 1]} : vector<8x384xf32> to vector<8x128xf32>
    %114 = vector.extract_strided_slice %104 {offsets = [0, 128], sizes = [8, 128], strides = [1, 1]} : vector<8x384xf32> to vector<8x128xf32>
    %115 = arith.addf %113, %114 : vector<8x128xf32>
    %116 = arith.negf %115 : vector<8x128xf32>
    %117 = math.exp %116 : vector<8x128xf32>
    %cst_41 = arith.constant 1.000000e+00 : f32
    %118 = vector.broadcast %cst_41 : f32 to vector<8x128xf32>
    %119 = arith.addf %118, %117 : vector<8x128xf32>
    %120 = arith.divf %118, %119 : vector<8x128xf32>
    %121 = vector.extract_strided_slice %102 {offsets = [0, 256], sizes = [8, 128], strides = [1, 1]} : vector<8x384xf32> to vector<8x128xf32>
    %122 = vector.extract_strided_slice %104 {offsets = [0, 256], sizes = [8, 128], strides = [1, 1]} : vector<8x384xf32> to vector<8x128xf32>
    %123 = arith.mulf %112, %122 : vector<8x128xf32>
    %124 = arith.addf %121, %123 : vector<8x128xf32>
    %125 = math.tanh %124 : vector<8x128xf32>
    %cst_42 = arith.constant 1.000000e+00 : f32
    %126 = vector.broadcast %cst_42 : f32 to vector<8x128xf32>
    %127 = arith.subf %126, %120 : vector<8x128xf32>
    %128 = arith.mulf %127, %125 : vector<8x128xf32>
    %129 = arith.mulf %120, %92 : vector<8x128xf32>
    %130 = arith.addf %128, %129 : vector<8x128xf32>
    %131 = arith.index_cast %100 : i32 to index
    %c0_43 = arith.constant 0 : index
    %132 = vector.load %arg7[%131, %c0_43] : memref<64x128xf32, #tpu.memory_space<vmem>>, vector<8x128xf32>
    tpu.vector_store %arg7[%131, %c0_43], %130 {strides = array<i32>} : memref<64x128xf32, #tpu.memory_space<vmem>>, vector<8x128xf32>,
    %c3_i32 = arith.constant 3 : i32
    %c2_i32_44 = arith.constant 2 : i32
    %133 = arith.muli %c2_i32_44, %c3_i32 : i32
    %c7_i32_45 = arith.constant 7 : i32
    %134 = arith.subi %c7_i32_45, %133 : i32
    %135 = arith.muli %arg0, %134 : i32
    %136 = arith.addi %c3_i32, %135 : i32
    %c8_i32_46 = arith.constant 8 : i32
    %137 = arith.muli %136, %c8_i32_46 : i32
    %138 = tpu.assume_multiple %137, 8 : i32
    %139 = arith.index_cast %138 : i32 to index
    %c0_47 = arith.constant 0 : index
    %140 = vector.load %arg10[%139, %c0_47] : memref<64x384xf32, #tpu.memory_space<vmem>>, vector<8x384xf32>
    %cst_48 = arith.constant dense<0.000000e+00> : vector<8x384xf32>
    %141 = tpu.matmul %130, %13, %cst_48 {dimension_numbers = #tpu.dot_dimension_numbers<[1], [0], [0], [1], [0, 0, 1, 1], [], []>} : vector<8x128xf32>, vector<128x384xf32>, vector<8x384xf32> -> vector<8x384xf32>
    %142 = arith.addf %141, %17 : vector<8x384xf32>
    %143 = vector.extract_strided_slice %140 {offsets = [0, 0], sizes = [8, 128], strides = [1, 1]} : vector<8x384xf32> to vector<8x128xf32>
    %144 = vector.extract_strided_slice %142 {offsets = [0, 0], sizes = [8, 128], strides = [1, 1]} : vector<8x384xf32> to vector<8x128xf32>
    %145 = arith.addf %143, %144 : vector<8x128xf32>
    %146 = arith.negf %145 : vector<8x128xf32>
    %147 = math.exp %146 : vector<8x128xf32>
    %cst_49 = arith.constant 1.000000e+00 : f32
    %148 = vector.broadcast %cst_49 : f32 to vector<8x128xf32>
    %149 = arith.addf %148, %147 : vector<8x128xf32>
    %150 = arith.divf %148, %149 : vector<8x128xf32>
    %151 = vector.extract_strided_slice %140 {offsets = [0, 128], sizes = [8, 128], strides = [1, 1]} : vector<8x384xf32> to vector<8x128xf32>
    %152 = vector.extract_strided_slice %142 {offsets = [0, 128], sizes = [8, 128], strides = [1, 1]} : vector<8x384xf32> to vector<8x128xf32>
    %153 = arith.addf %151, %152 : vector<8x128xf32>
    %154 = arith.negf %153 : vector<8x128xf32>
    %155 = math.exp %154 : vector<8x128xf32>
    %cst_50 = arith.constant 1.000000e+00 : f32
    %156 = vector.broadcast %cst_50 : f32 to vector<8x128xf32>
    %157 = arith.addf %156, %155 : vector<8x128xf32>
    %158 = arith.divf %156, %157 : vector<8x128xf32>
    %159 = vector.extract_strided_slice %140 {offsets = [0, 256], sizes = [8, 128], strides = [1, 1]} : vector<8x384xf32> to vector<8x128xf32>
    %160 = vector.extract_strided_slice %142 {offsets = [0, 256], sizes = [8, 128], strides = [1, 1]} : vector<8x384xf32> to vector<8x128xf32>
    %161 = arith.mulf %150, %160 : vector<8x128xf32>
    %162 = arith.addf %159, %161 : vector<8x128xf32>
    %163 = math.tanh %162 : vector<8x128xf32>
    %cst_51 = arith.constant 1.000000e+00 : f32
    %164 = vector.broadcast %cst_51 : f32 to vector<8x128xf32>
    %165 = arith.subf %164, %158 : vector<8x128xf32>
    %166 = arith.mulf %165, %163 : vector<8x128xf32>
    %167 = arith.mulf %158, %130 : vector<8x128xf32>
    %168 = arith.addf %166, %167 : vector<8x128xf32>
    %169 = arith.index_cast %138 : i32 to index
    %c0_52 = arith.constant 0 : index
    %170 = vector.load %arg7[%169, %c0_52] : memref<64x128xf32, #tpu.memory_space<vmem>>, vector<8x128xf32>
    tpu.vector_store %arg7[%169, %c0_52], %168 {strides = array<i32>} : memref<64x128xf32, #tpu.memory_space<vmem>>, vector<8x128xf32>,
    %c4_i32 = arith.constant 4 : i32
    %c2_i32_53 = arith.constant 2 : i32
    %171 = arith.muli %c2_i32_53, %c4_i32 : i32
    %c7_i32_54 = arith.constant 7 : i32
    %172 = arith.subi %c7_i32_54, %171 : i32
    %173 = arith.muli %arg0, %172 : i32
    %174 = arith.addi %c4_i32, %173 : i32
    %c8_i32_55 = arith.constant 8 : i32
    %175 = arith.muli %174, %c8_i32_55 : i32
    %176 = tpu.assume_multiple %175, 8 : i32
    %177 = arith.index_cast %176 : i32 to index
    %c0_56 = arith.constant 0 : index
    %178 = vector.load %arg10[%177, %c0_56] : memref<64x384xf32, #tpu.memory_space<vmem>>, vector<8x384xf32>
    %cst_57 = arith.constant dense<0.000000e+00> : vector<8x384xf32>
    %179 = tpu.matmul %168, %13, %cst_57 {dimension_numbers = #tpu.dot_dimension_numbers<[1], [0], [0], [1], [0, 0, 1, 1], [], []>} : vector<8x128xf32>, vector<128x384xf32>, vector<8x384xf32> -> vector<8x384xf32>
    %180 = arith.addf %179, %17 : vector<8x384xf32>
    %181 = vector.extract_strided_slice %178 {offsets = [0, 0], sizes = [8, 128], strides = [1, 1]} : vector<8x384xf32> to vector<8x128xf32>
    %182 = vector.extract_strided_slice %180 {offsets = [0, 0], sizes = [8, 128], strides = [1, 1]} : vector<8x384xf32> to vector<8x128xf32>
    %183 = arith.addf %181, %182 : vector<8x128xf32>
    %184 = arith.negf %183 : vector<8x128xf32>
    %185 = math.exp %184 : vector<8x128xf32>
    %cst_58 = arith.constant 1.000000e+00 : f32
    %186 = vector.broadcast %cst_58 : f32 to vector<8x128xf32>
    %187 = arith.addf %186, %185 : vector<8x128xf32>
    %188 = arith.divf %186, %187 : vector<8x128xf32>
    %189 = vector.extract_strided_slice %178 {offsets = [0, 128], sizes = [8, 128], strides = [1, 1]} : vector<8x384xf32> to vector<8x128xf32>
    %190 = vector.extract_strided_slice %180 {offsets = [0, 128], sizes = [8, 128], strides = [1, 1]} : vector<8x384xf32> to vector<8x128xf32>
    %191 = arith.addf %189, %190 : vector<8x128xf32>
    %192 = arith.negf %191 : vector<8x128xf32>
    %193 = math.exp %192 : vector<8x128xf32>
    %cst_59 = arith.constant 1.000000e+00 : f32
    %194 = vector.broadcast %cst_59 : f32 to vector<8x128xf32>
    %195 = arith.addf %194, %193 : vector<8x128xf32>
    %196 = arith.divf %194, %195 : vector<8x128xf32>
    %197 = vector.extract_strided_slice %178 {offsets = [0, 256], sizes = [8, 128], strides = [1, 1]} : vector<8x384xf32> to vector<8x128xf32>
    %198 = vector.extract_strided_slice %180 {offsets = [0, 256], sizes = [8, 128], strides = [1, 1]} : vector<8x384xf32> to vector<8x128xf32>
    %199 = arith.mulf %188, %198 : vector<8x128xf32>
    %200 = arith.addf %197, %199 : vector<8x128xf32>
    %201 = math.tanh %200 : vector<8x128xf32>
    %cst_60 = arith.constant 1.000000e+00 : f32
    %202 = vector.broadcast %cst_60 : f32 to vector<8x128xf32>
    %203 = arith.subf %202, %196 : vector<8x128xf32>
    %204 = arith.mulf %203, %201 : vector<8x128xf32>
    %205 = arith.mulf %196, %168 : vector<8x128xf32>
    %206 = arith.addf %204, %205 : vector<8x128xf32>
    %207 = arith.index_cast %176 : i32 to index
    %c0_61 = arith.constant 0 : index
    %208 = vector.load %arg7[%207, %c0_61] : memref<64x128xf32, #tpu.memory_space<vmem>>, vector<8x128xf32>
    tpu.vector_store %arg7[%207, %c0_61], %206 {strides = array<i32>} : memref<64x128xf32, #tpu.memory_space<vmem>>, vector<8x128xf32>,
    %c5_i32 = arith.constant 5 : i32
    %c2_i32_62 = arith.constant 2 : i32
    %209 = arith.muli %c2_i32_62, %c5_i32 : i32
    %c7_i32_63 = arith.constant 7 : i32
    %210 = arith.subi %c7_i32_63, %209 : i32
    %211 = arith.muli %arg0, %210 : i32
    %212 = arith.addi %c5_i32, %211 : i32
    %c8_i32_64 = arith.constant 8 : i32
    %213 = arith.muli %212, %c8_i32_64 : i32
    %214 = tpu.assume_multiple %213, 8 : i32
    %215 = arith.index_cast %214 : i32 to index
    %c0_65 = arith.constant 0 : index
    %216 = vector.load %arg10[%215, %c0_65] : memref<64x384xf32, #tpu.memory_space<vmem>>, vector<8x384xf32>
    %cst_66 = arith.constant dense<0.000000e+00> : vector<8x384xf32>
    %217 = tpu.matmul %206, %13, %cst_66 {dimension_numbers = #tpu.dot_dimension_numbers<[1], [0], [0], [1], [0, 0, 1, 1], [], []>} : vector<8x128xf32>, vector<128x384xf32>, vector<8x384xf32> -> vector<8x384xf32>
    %218 = arith.addf %217, %17 : vector<8x384xf32>
    %219 = vector.extract_strided_slice %216 {offsets = [0, 0], sizes = [8, 128], strides = [1, 1]} : vector<8x384xf32> to vector<8x128xf32>
    %220 = vector.extract_strided_slice %218 {offsets = [0, 0], sizes = [8, 128], strides = [1, 1]} : vector<8x384xf32> to vector<8x128xf32>
    %221 = arith.addf %219, %220 : vector<8x128xf32>
    %222 = arith.negf %221 : vector<8x128xf32>
    %223 = math.exp %222 : vector<8x128xf32>
    %cst_67 = arith.constant 1.000000e+00 : f32
    %224 = vector.broadcast %cst_67 : f32 to vector<8x128xf32>
    %225 = arith.addf %224, %223 : vector<8x128xf32>
    %226 = arith.divf %224, %225 : vector<8x128xf32>
    %227 = vector.extract_strided_slice %216 {offsets = [0, 128], sizes = [8, 128], strides = [1, 1]} : vector<8x384xf32> to vector<8x128xf32>
    %228 = vector.extract_strided_slice %218 {offsets = [0, 128], sizes = [8, 128], strides = [1, 1]} : vector<8x384xf32> to vector<8x128xf32>
    %229 = arith.addf %227, %228 : vector<8x128xf32>
    %230 = arith.negf %229 : vector<8x128xf32>
    %231 = math.exp %230 : vector<8x128xf32>
    %cst_68 = arith.constant 1.000000e+00 : f32
    %232 = vector.broadcast %cst_68 : f32 to vector<8x128xf32>
    %233 = arith.addf %232, %231 : vector<8x128xf32>
    %234 = arith.divf %232, %233 : vector<8x128xf32>
    %235 = vector.extract_strided_slice %216 {offsets = [0, 256], sizes = [8, 128], strides = [1, 1]} : vector<8x384xf32> to vector<8x128xf32>
    %236 = vector.extract_strided_slice %218 {offsets = [0, 256], sizes = [8, 128], strides = [1, 1]} : vector<8x384xf32> to vector<8x128xf32>
    %237 = arith.mulf %226, %236 : vector<8x128xf32>
    %238 = arith.addf %235, %237 : vector<8x128xf32>
    %239 = math.tanh %238 : vector<8x128xf32>
    %cst_69 = arith.constant 1.000000e+00 : f32
    %240 = vector.broadcast %cst_69 : f32 to vector<8x128xf32>
    %241 = arith.subf %240, %234 : vector<8x128xf32>
    %242 = arith.mulf %241, %239 : vector<8x128xf32>
    %243 = arith.mulf %234, %206 : vector<8x128xf32>
    %244 = arith.addf %242, %243 : vector<8x128xf32>
    %245 = arith.index_cast %214 : i32 to index
    %c0_70 = arith.constant 0 : index
    %246 = vector.load %arg7[%245, %c0_70] : memref<64x128xf32, #tpu.memory_space<vmem>>, vector<8x128xf32>
    tpu.vector_store %arg7[%245, %c0_70], %244 {strides = array<i32>} : memref<64x128xf32, #tpu.memory_space<vmem>>, vector<8x128xf32>,
    %c6_i32 = arith.constant 6 : i32
    %c2_i32_71 = arith.constant 2 : i32
    %247 = arith.muli %c2_i32_71, %c6_i32 : i32
    %c7_i32_72 = arith.constant 7 : i32
    %248 = arith.subi %c7_i32_72, %247 : i32
    %249 = arith.muli %arg0, %248 : i32
    %250 = arith.addi %c6_i32, %249 : i32
    %c8_i32_73 = arith.constant 8 : i32
    %251 = arith.muli %250, %c8_i32_73 : i32
    %252 = tpu.assume_multiple %251, 8 : i32
    %253 = arith.index_cast %252 : i32 to index
    %c0_74 = arith.constant 0 : index
    %254 = vector.load %arg10[%253, %c0_74] : memref<64x384xf32, #tpu.memory_space<vmem>>, vector<8x384xf32>
    %cst_75 = arith.constant dense<0.000000e+00> : vector<8x384xf32>
    %255 = tpu.matmul %244, %13, %cst_75 {dimension_numbers = #tpu.dot_dimension_numbers<[1], [0], [0], [1], [0, 0, 1, 1], [], []>} : vector<8x128xf32>, vector<128x384xf32>, vector<8x384xf32> -> vector<8x384xf32>
    %256 = arith.addf %255, %17 : vector<8x384xf32>
    %257 = vector.extract_strided_slice %254 {offsets = [0, 0], sizes = [8, 128], strides = [1, 1]} : vector<8x384xf32> to vector<8x128xf32>
    %258 = vector.extract_strided_slice %256 {offsets = [0, 0], sizes = [8, 128], strides = [1, 1]} : vector<8x384xf32> to vector<8x128xf32>
    %259 = arith.addf %257, %258 : vector<8x128xf32>
    %260 = arith.negf %259 : vector<8x128xf32>
    %261 = math.exp %260 : vector<8x128xf32>
    %cst_76 = arith.constant 1.000000e+00 : f32
    %262 = vector.broadcast %cst_76 : f32 to vector<8x128xf32>
    %263 = arith.addf %262, %261 : vector<8x128xf32>
    %264 = arith.divf %262, %263 : vector<8x128xf32>
    %265 = vector.extract_strided_slice %254 {offsets = [0, 128], sizes = [8, 128], strides = [1, 1]} : vector<8x384xf32> to vector<8x128xf32>
    %266 = vector.extract_strided_slice %256 {offsets = [0, 128], sizes = [8, 128], strides = [1, 1]} : vector<8x384xf32> to vector<8x128xf32>
    %267 = arith.addf %265, %266 : vector<8x128xf32>
    %268 = arith.negf %267 : vector<8x128xf32>
    %269 = math.exp %268 : vector<8x128xf32>
    %cst_77 = arith.constant 1.000000e+00 : f32
    %270 = vector.broadcast %cst_77 : f32 to vector<8x128xf32>
    %271 = arith.addf %270, %269 : vector<8x128xf32>
    %272 = arith.divf %270, %271 : vector<8x128xf32>
    %273 = vector.extract_strided_slice %254 {offsets = [0, 256], sizes = [8, 128], strides = [1, 1]} : vector<8x384xf32> to vector<8x128xf32>
    %274 = vector.extract_strided_slice %256 {offsets = [0, 256], sizes = [8, 128], strides = [1, 1]} : vector<8x384xf32> to vector<8x128xf32>
    %275 = arith.mulf %264, %274 : vector<8x128xf32>
    %276 = arith.addf %273, %275 : vector<8x128xf32>
    %277 = math.tanh %276 : vector<8x128xf32>
    %cst_78 = arith.constant 1.000000e+00 : f32
    %278 = vector.broadcast %cst_78 : f32 to vector<8x128xf32>
    %279 = arith.subf %278, %272 : vector<8x128xf32>
    %280 = arith.mulf %279, %277 : vector<8x128xf32>
    %281 = arith.mulf %272, %244 : vector<8x128xf32>
    %282 = arith.addf %280, %281 : vector<8x128xf32>
    %283 = arith.index_cast %252 : i32 to index
    %c0_79 = arith.constant 0 : index
    %284 = vector.load %arg7[%283, %c0_79] : memref<64x128xf32, #tpu.memory_space<vmem>>, vector<8x128xf32>
    tpu.vector_store %arg7[%283, %c0_79], %282 {strides = array<i32>} : memref<64x128xf32, #tpu.memory_space<vmem>>, vector<8x128xf32>,
    %c7_i32_80 = arith.constant 7 : i32
    %c2_i32_81 = arith.constant 2 : i32
    %285 = arith.muli %c2_i32_81, %c7_i32_80 : i32
    %c7_i32_82 = arith.constant 7 : i32
    %286 = arith.subi %c7_i32_82, %285 : i32
    %287 = arith.muli %arg0, %286 : i32
    %288 = arith.addi %c7_i32_80, %287 : i32
    %c8_i32_83 = arith.constant 8 : i32
    %289 = arith.muli %288, %c8_i32_83 : i32
    %290 = tpu.assume_multiple %289, 8 : i32
    %291 = arith.index_cast %290 : i32 to index
    %c0_84 = arith.constant 0 : index
    %292 = vector.load %arg10[%291, %c0_84] : memref<64x384xf32, #tpu.memory_space<vmem>>, vector<8x384xf32>
    %cst_85 = arith.constant dense<0.000000e+00> : vector<8x384xf32>
    %293 = tpu.matmul %282, %13, %cst_85 {dimension_numbers = #tpu.dot_dimension_numbers<[1], [0], [0], [1], [0, 0, 1, 1], [], []>} : vector<8x128xf32>, vector<128x384xf32>, vector<8x384xf32> -> vector<8x384xf32>
    %294 = arith.addf %293, %17 : vector<8x384xf32>
    %295 = vector.extract_strided_slice %292 {offsets = [0, 0], sizes = [8, 128], strides = [1, 1]} : vector<8x384xf32> to vector<8x128xf32>
    %296 = vector.extract_strided_slice %294 {offsets = [0, 0], sizes = [8, 128], strides = [1, 1]} : vector<8x384xf32> to vector<8x128xf32>
    %297 = arith.addf %295, %296 : vector<8x128xf32>
    %298 = arith.negf %297 : vector<8x128xf32>
    %299 = math.exp %298 : vector<8x128xf32>
    %cst_86 = arith.constant 1.000000e+00 : f32
    %300 = vector.broadcast %cst_86 : f32 to vector<8x128xf32>
    %301 = arith.addf %300, %299 : vector<8x128xf32>
    %302 = arith.divf %300, %301 : vector<8x128xf32>
    %303 = vector.extract_strided_slice %292 {offsets = [0, 128], sizes = [8, 128], strides = [1, 1]} : vector<8x384xf32> to vector<8x128xf32>
    %304 = vector.extract_strided_slice %294 {offsets = [0, 128], sizes = [8, 128], strides = [1, 1]} : vector<8x384xf32> to vector<8x128xf32>
    %305 = arith.addf %303, %304 : vector<8x128xf32>
    %306 = arith.negf %305 : vector<8x128xf32>
    %307 = math.exp %306 : vector<8x128xf32>
    %cst_87 = arith.constant 1.000000e+00 : f32
    %308 = vector.broadcast %cst_87 : f32 to vector<8x128xf32>
    %309 = arith.addf %308, %307 : vector<8x128xf32>
    %310 = arith.divf %308, %309 : vector<8x128xf32>
    %311 = vector.extract_strided_slice %292 {offsets = [0, 256], sizes = [8, 128], strides = [1, 1]} : vector<8x384xf32> to vector<8x128xf32>
    %312 = vector.extract_strided_slice %294 {offsets = [0, 256], sizes = [8, 128], strides = [1, 1]} : vector<8x384xf32> to vector<8x128xf32>
    %313 = arith.mulf %302, %312 : vector<8x128xf32>
    %314 = arith.addf %311, %313 : vector<8x128xf32>
    %315 = math.tanh %314 : vector<8x128xf32>
    %cst_88 = arith.constant 1.000000e+00 : f32
    %316 = vector.broadcast %cst_88 : f32 to vector<8x128xf32>
    %317 = arith.subf %316, %310 : vector<8x128xf32>
    %318 = arith.mulf %317, %315 : vector<8x128xf32>
    %319 = arith.mulf %310, %282 : vector<8x128xf32>
    %320 = arith.addf %318, %319 : vector<8x128xf32>
    %321 = arith.index_cast %290 : i32 to index
    %c0_89 = arith.constant 0 : index
    %322 = vector.load %arg7[%321, %c0_89] : memref<64x128xf32, #tpu.memory_space<vmem>>, vector<8x128xf32>
    tpu.vector_store %arg7[%321, %c0_89], %320 {strides = array<i32>} : memref<64x128xf32, #tpu.memory_space<vmem>>, vector<8x128xf32>,
    %c8_i32_90 = arith.constant 8 : i32
    %c0_91 = arith.constant 0 : index
    %c0_92 = arith.constant 0 : index
    %323 = vector.load %arg9[%c0_91, %c0_92] : memref<8x128xf32, #tpu.memory_space<vmem>>, vector<8x128xf32>
    tpu.vector_store %arg9[%c0_91, %c0_92], %320 {strides = array<i32>} : memref<8x128xf32, #tpu.memory_space<vmem>>, vector<8x128xf32>,
    %c0_93 = arith.constant 0 : index
    %c0_94 = arith.constant 0 : index
    %c0_95 = arith.constant 0 : index
    %324 = vector.load %arg8[%c0_93, %c0_94, %c0_95] : memref<1x8x128xf32, #tpu.memory_space<vmem>>, vector<1x8x128xf32>
    %325 = vector.shape_cast %324 : vector<1x8x128xf32> to vector<8x128xf32>
    %326 = vector.shape_cast %320 : vector<8x128xf32> to vector<1x8x128xf32>
    tpu.vector_store %arg8[%c0_93, %c0_94, %c0_95], %326 {strides = array<i32>} : memref<1x8x128xf32, #tpu.memory_space<vmem>>, vector<1x8x128xf32>,
    return
  }
  func.func @transform_0(%arg0: i32, %arg1: i32) -> (i32, i32) {
    %c2_i32 = arith.constant 2 : i32
    %0 = arith.muli %c2_i32, %arg1 : i32
    %c0_i32 = arith.constant 0 : i32
    %1 = arith.subi %c0_i32, %0 : i32
    %2 = arith.muli %arg0, %1 : i32
    %3 = arith.addi %arg1, %2 : i32
    %c0_i32_0 = arith.constant 0 : i32
    %c0_i32_1 = arith.constant 0 : i32
    return %3, %c0_i32_0 : i32, i32
  }
  func.func @transform_1(%arg0: i32, %arg1: i32) -> (i32, i32, i32) {
    %c0_i32 = arith.constant 0 : i32
    %c0_i32_0 = arith.constant 0 : i32
    %c0_i32_1 = arith.constant 0 : i32
    return %arg0, %c0_i32, %c0_i32_0 : i32, i32, i32
  }
  func.func @transform_2(%arg0: i32, %arg1: i32) -> (i32, i32, i32) {
    %c0_i32 = arith.constant 0 : i32
    %c0_i32_0 = arith.constant 0 : i32
    %c0_i32_1 = arith.constant 0 : i32
    return %arg0, %c0_i32, %c0_i32_0 : i32, i32, i32
  }
  func.func @transform_3(%arg0: i32, %arg1: i32) -> (i32, i32, i32) {
    %c0_i32 = arith.constant 0 : i32
    %c0_i32_0 = arith.constant 0 : i32
    %c0_i32_1 = arith.constant 0 : i32
    return %arg0, %c0_i32, %c0_i32_0 : i32, i32, i32
  }
  func.func @transform_4(%arg0: i32, %arg1: i32) -> (i32, i32, i32) {
    %c0_i32 = arith.constant 0 : i32
    %c0_i32_0 = arith.constant 0 : i32
    %c0_i32_1 = arith.constant 0 : i32
    return %arg0, %c0_i32, %c0_i32_0 : i32, i32, i32
  }
  func.func @transform_5(%arg0: i32, %arg1: i32) -> (i32, i32) {
    %c2_i32 = arith.constant 2 : i32
    %0 = arith.muli %c2_i32, %arg1 : i32
    %c0_i32 = arith.constant 0 : i32
    %1 = arith.subi %c0_i32, %0 : i32
    %2 = arith.muli %arg0, %1 : i32
    %3 = arith.addi %arg1, %2 : i32
    %c0_i32_0 = arith.constant 0 : i32
    return %3, %arg0 : i32, i32
  }
  func.func @transform_6(%arg0: i32, %arg1: i32) -> (i32, i32, i32) {
    %c0_i32 = arith.constant 0 : i32
    %c0_i32_0 = arith.constant 0 : i32
    %c0_i32_1 = arith.constant 0 : i32
    return %arg0, %c0_i32, %c0_i32_0 : i32, i32, i32
  }
}

</mosaic_0001>

<llo_original>
// kernel: attn_encoder_forward.1
$region0: #{attn_encoder_forward.1}
  #allocation0 [shape = 'u32[]', space=smem, size = 0x4, offset = 0x4, fixed_abs, tag = 'smem constant byte address 0x4 - core index']
  #allocation1 [shape = 'u32[72,128]{1,0:T(1,128)}', space=vmem, size = 0x9000, scoped, tag = 'internal scratch']
  #allocation2 [shape = 'f32[8,128]{1,0:T(8,128)}', space=vmem, size = 0x1000, scoped, tag = 'scratch operand']
  #allocation3 [shape = 'f32[64,384]{1,0:T(8,128)}', space=vmem, size = 0x18000, scoped, tag = 'scratch operand']
  %s0 = inlined_call_operand.vmem [shape: f32[64,16], index: 0, kind: input, shape index: {}]
  %s1 = inlined_call_operand.vmem [shape: f32[2,16,384], index: 1, kind: input, shape index: {}]
  %s2 = inlined_call_operand.vmem [shape: f32[2,1,384], index: 2, kind: input, shape index: {}]
  %s3 = inlined_call_operand.hbm [shape: f32[2,128,384], index: 3, kind: input, shape index: {}]
  %s4 = inlined_call_operand.vmem [shape: f32[2,1,384], index: 4, kind: input, shape index: {}]
  %s5 = inlined_call_operand.vmem [shape: f32[64,256], index: 5, kind: output, shape index: {0}]
  %s6 = inlined_call_operand.vmem [shape: f32[2,8,128], index: 6, kind: output, shape index: {1}]
  %7 = xla_tuple %s5, %s6
  %s8 = sld [smem:[#allocation0]]
  $region103: #{attn_encoder_forward.1} parent=0
    _
  %s10 = ssub.s32 1, %s8
  %s11 = scalar_select 0, %s10, %s8
  $region1: #{attn_encoder_forward.1} parent=0
    #allocation4 [shape = 'u8[393216]{0}', space=vmem, size = 0x60000, scoped, tag = 'input window, operand 3']
    #allocation5 [shape = 's32[2]{0}', space=sflag, size = 0x8, scoped, tag = 'scoped memory for attn_encoder_forward.1']
    #allocation6 [shape = 'u8[65536]{0}', space=vmem, size = 0x10000, scoped, tag = 'output window, operand 0']
    %12 = vsyncpa [#allocation5], 0
    %s13 = scalar_lea.sflag [#allocation5], 1
    %14 = vsyncpa %s13, 0
    loop: start=0, step=1, limit=4
    $region2: #{attn_encoder_forward.1} parent=1 // loop_pre_header
      _
    $region3: #{attn_encoder_forward.1} parent=1 // loop_header
      %s16 = sphi 0, %s20
      %p17 = scmp.ge.s32.totalorder %s16, 4
      %s23 = sphi 0, %s35
      %s24 = sphi 0, %s31
      %s25 = sphi 0, %s23
      %s26 = sphi 0, %s24
      %s27 = sphi 0, %s25
      %s28 = sphi 0, %s26
      %s46 = sphi 0, %s48
      %s49 = sphi 0, %s46
      %s50 = sphi 0, %s49
      %s66 = sphi 0, %s50
      %s72 = sphi 0, %s74
      %s75 = sphi 0, %s72
      %s76 = sphi 0, %s75
      %s92 = sphi 0, %s76
      %s98 = sphi 0, %s100
      %s101 = sphi 0, %s98
      %s102 = sphi 0, %s101
      %s118 = sphi 0, %s102
      %s124 = sphi 0, %s126
      %s127 = sphi 0, %s124
      %s128 = sphi 0, %s127
      %s144 = sphi 0, %s128
      %s150 = sphi 0, %s152
      %s153 = sphi 0, %s150
      %s154 = sphi 0, %s153
      %s170 = sphi 0, %s154
      %s186 = sphi 0, %s188
      %s189 = sphi 0, %s186
      %s190 = sphi 0, %s189
      %s206 = sphi 0, %s190
      %s212 = sphi 0, %s214
      %s215 = sphi 0, %s212
      %s216 = sphi 0, %s215
      %s232 = sphi 0, %s216
    $region4: #{attn_encoder_forward.1} parent=1 // loop_header_branch
      %19 = sbr.rel (%p17) target = $region8
    $region5: #{attn_encoder_forward.1} parent=1 // loop_body
      %s21 = ssub.s32 %s16, 1
      %s22 = ssub.s32 %s16, 2
      %s29 = sadd.s32 1, %s24
      %p30 = scmp.ge.s32.totalorder %s29, 1
      %s31 = scalar_select %p30, 0, %s29
      %s32 = sadd.s32 1, %s23
      %s33 = scalar_select %p30, %s32, %s23
      %p34 = scmp.ge.s32.totalorder %s33, 2
      %s35 = scalar_select %p34, 0, %s33
      %s36 = smul.u32 %s24, 2
      %s37 = ssub.s32 0, %s36
      %s38 = smul.u32 %s23, %s37
      %s39 = sadd.s32 %s24, %s38
      %s40 = smul.u32 %s31, 2
      %s41 = ssub.s32 0, %s40
      %s42 = smul.u32 %s35, %s41
      %s43 = sadd.s32 %s31, %s42
      %s44 = ssub.s32 %s39, %s43
      %p45 = scmp.eq.s32.totalorder %s44, 0
      %s47 = sadd.s32 %s46, 1
      %s48 = scalar_select %p45, %s46, %s47
      %p51 = pneg %p45
      %p52 = scmp.eq.s32.totalorder %s16, 1
      %p53 = por %p51, %p52
      %p54 = scmp.ne.s32.totalorder %s46, %s49
      %p55 = scmp.eq.s32.totalorder %s16, 0
      %p56 = por %p54, %p55
      %p57 = scmp.ne.s32.totalorder %s46, %s49
      %p58 = scmp.eq.s32.totalorder %s21, 1
      %p59 = por %p57, %p58
      %p60 = scmp.ne.s32.totalorder %s49, %s50
      %p61 = scmp.eq.s32.totalorder %s21, 0
      %p62 = por %p60, %p61
      %p63 = scmp.ne.s32.totalorder %s49, %s50
      %p64 = scmp.eq.s32.totalorder %s22, 1
      %p65 = por %p63, %p64
      %p67 = scmp.ne.s32.totalorder %s50, %s66
      %p68 = scmp.eq.s32.totalorder %s22, 0
      %p69 = por %p67, %p68
      %s70 = ssub.s32 %s23, %s35
      %p71 = scmp.eq.s32.totalorder %s70, 0
      %s73 = sadd.s32 %s72, 1
      %s74 = scalar_select %p71, %s72, %s73
      %p77 = pneg %p71
      %p78 = scmp.eq.s32.totalorder %s16, 1
      %p79 = por %p77, %p78
      %p80 = scmp.ne.s32.totalorder %s72, %s75
      %p81 = scmp.eq.s32.totalorder %s16, 0
      %p82 = por %p80, %p81
      %p83 = scmp.ne.s32.totalorder %s72, %s75
      %p84 = scmp.eq.s32.totalorder %s21, 1
      %p85 = por %p83, %p84
      %p86 = scmp.ne.s32.totalorder %s75, %s76
      %p87 = scmp.eq.s32.totalorder %s21, 0
      %p88 = por %p86, %p87
      %p89 = scmp.ne.s32.totalorder %s75, %s76
      %p90 = scmp.eq.s32.totalorder %s22, 1
      %p91 = por %p89, %p90
      %p93 = scmp.ne.s32.totalorder %s76, %s92
      %p94 = scmp.eq.s32.totalorder %s22, 0
      %p95 = por %p93, %p94
      %s96 = ssub.s32 %s23, %s35
      %p97 = scmp.eq.s32.totalorder %s96, 0
      %s99 = sadd.s32 %s98, 1
      %s100 = scalar_select %p97, %s98, %s99
      %p103 = pneg %p97
      %p104 = scmp.eq.s32.totalorder %s16, 1
      %p105 = por %p103, %p104
      %p106 = scmp.ne.s32.totalorder %s98, %s101
      %p107 = scmp.eq.s32.totalorder %s16, 0
      %p108 = por %p106, %p107
      %p109 = scmp.ne.s32.totalorder %s98, %s101
      %p110 = scmp.eq.s32.totalorder %s21, 1
      %p111 = por %p109, %p110
      %p112 = scmp.ne.s32.totalorder %s101, %s102
      %p113 = scmp.eq.s32.totalorder %s21, 0
      %p114 = por %p112, %p113
      %p115 = scmp.ne.s32.totalorder %s101, %s102
      %p116 = scmp.eq.s32.totalorder %s22, 1
      %p117 = por %p115, %p116
      %p119 = scmp.ne.s32.totalorder %s102, %s118
      %p120 = scmp.eq.s32.totalorder %s22, 0
      %p121 = por %p119, %p120
      %s122 = ssub.s32 %s23, %s35
      %p123 = scmp.eq.s32.totalorder %s122, 0
      %s125 = sadd.s32 %s124, 1
      %s126 = scalar_select %p123, %s124, %s125
      %p129 = pneg %p123
      %p130 = scmp.eq.s32.totalorder %s16, 1
      %p131 = por %p129, %p130
      %p132 = scmp.ne.s32.totalorder %s124, %s127
      %p133 = scmp.eq.s32.totalorder %s16, 0
      %p134 = por %p132, %p133
      %p135 = scmp.ne.s32.totalorder %s124, %s127
      %p136 = scmp.eq.s32.totalorder %s21, 1
      %p137 = por %p135, %p136
      %p138 = scmp.ne.s32.totalorder %s127, %s128
      %p139 = scmp.eq.s32.totalorder %s21, 0
      %p140 = por %p138, %p139
      %p141 = scmp.ne.s32.totalorder %s127, %s128
      %p142 = scmp.eq.s32.totalorder %s22, 1
      %p143 = por %p141, %p142
      %p145 = scmp.ne.s32.totalorder %s128, %s144
      %p146 = scmp.eq.s32.totalorder %s22, 0
      %p147 = por %p145, %p146
      %s148 = ssub.s32 %s23, %s35
      %p149 = scmp.eq.s32.totalorder %s148, 0
      %s151 = sadd.s32 %s150, 1
      %s152 = scalar_select %p149, %s150, %s151
      %p155 = pneg %p149
      %p156 = scmp.eq.s32.totalorder %s16, 1
      %p157 = por %p155, %p156
      %p158 = scmp.ne.s32.totalorder %s150, %s153
      %p159 = scmp.eq.s32.totalorder %s16, 0
      %p160 = por %p158, %p159
      %p161 = scmp.ne.s32.totalorder %s150, %s153
      %p162 = scmp.eq.s32.totalorder %s21, 1
      %p163 = por %p161, %p162
      %p164 = scmp.ne.s32.totalorder %s153, %s154
      %p165 = scmp.eq.s32.totalorder %s21, 0
      %p166 = por %p164, %p165
      %p167 = scmp.ne.s32.totalorder %s153, %s154
      %p168 = scmp.eq.s32.totalorder %s22, 1
      %p169 = por %p167, %p168
      %p171 = scmp.ne.s32.totalorder %s154, %s170
      %p172 = scmp.eq.s32.totalorder %s22, 0
      %p173 = por %p171, %p172
      %s174 = smul.u32 %s24, 2
      %s175 = ssub.s32 0, %s174
      %s176 = smul.u32 %s23, %s175
      %s177 = sadd.s32 %s24, %s176
      %s178 = smul.u32 %s31, 2
      %s179 = ssub.s32 0, %s178
      %s180 = smul.u32 %s35, %s179
      %s181 = sadd.s32 %s31, %s180
      %s182 = ssub.s32 %s177, %s181
      %s183 = ssub.s32 %s23, %s35
      %s184 = sor.u32 %s182, %s183
      %p185 = scmp.eq.s32.totalorder %s184, 0
      %s187 = sadd.s32 %s186, 1
      %s188 = scalar_select %p185, %s186, %s187
      %p191 = pneg %p185
      %p192 = scmp.eq.s32.totalorder %s16, 1
      %p193 = por %p191, %p192
      %p194 = scmp.ne.s32.totalorder %s186, %s189
      %p195 = scmp.eq.s32.totalorder %s16, 0
      %p196 = por %p194, %p195
      %p197 = scmp.ne.s32.totalorder %s186, %s189
      %p198 = scmp.eq.s32.totalorder %s21, 1
      %p199 = por %p197, %p198
      %p200 = scmp.ne.s32.totalorder %s189, %s190
      %p201 = scmp.eq.s32.totalorder %s21, 0
      %p202 = por %p200, %p201
      %p203 = scmp.ne.s32.totalorder %s189, %s190
      %p204 = scmp.eq.s32.totalorder %s22, 1
      %p205 = por %p203, %p204
      %p207 = scmp.ne.s32.totalorder %s190, %s206
      %p208 = scmp.eq.s32.totalorder %s22, 0
      %p209 = por %p207, %p208
      %s210 = ssub.s32 %s23, %s35
      %p211 = scmp.eq.s32.totalorder %s210, 0
      %s213 = sadd.s32 %s212, 1
      %s214 = scalar_select %p211, %s212, %s213
      %p217 = pneg %p211
      %p218 = scmp.eq.s32.totalorder %s16, 1
      %p219 = por %p217, %p218
      %p220 = scmp.ne.s32.totalorder %s212, %s215
      %p221 = scmp.eq.s32.totalorder %s16, 0
      %p222 = por %p220, %p221
      %p223 = scmp.ne.s32.totalorder %s212, %s215
      %p224 = scmp.eq.s32.totalorder %s21, 1
      %p225 = por %p223, %p224
      %p226 = scmp.ne.s32.totalorder %s215, %s216
      %p227 = scmp.eq.s32.totalorder %s21, 0
      %p228 = por %p226, %p227
      %p229 = scmp.ne.s32.totalorder %s215, %s216
      %p230 = scmp.eq.s32.totalorder %s22, 1
      %p231 = por %p229, %p230
      %p233 = scmp.ne.s32.totalorder %s216, %s232
      %p234 = scmp.eq.s32.totalorder %s22, 0
      %p235 = por %p233, %p234
      %p236 = scmp.le.s32.totalorder 1, %s16
      %p237 = scmp.lt.s32.totalorder %s16, 3
      %p238 = pnand %p236, %p237
      %p239 = pneg %p238
      // Predicated region
      $region9: #{attn_encoder_forward.1} parent=5 // pred_check
        _
      $region10: #{attn_encoder_forward.1} parent=5 // pred_check_branch
        %241 = sbr.rel (%p238) target = $region12
      $region11: #{attn_encoder_forward.1} parent=5 // pred_region
        %s242 = ssub.s32 %s16, 1
      $region12: #{attn_encoder_forward.1} parent=5 // pred_fallthru
        _
      %p243 = scmp.lt.s32.totalorder %s16, 2
      // Predicated region
      $region13: #{attn_encoder_forward.1} parent=5 // pred_check
        %p244 = pneg %p243
      $region14: #{attn_encoder_forward.1} parent=5 // pred_check_branch
        %246 = sbr.rel (%p244) target = $region16
      $region15: #{attn_encoder_forward.1} parent=5 // pred_region
        // Predicated region
        $region17: #{attn_encoder_forward.1} parent=15 // pred_check
          %p247 = pneg %p56
        $region18: #{attn_encoder_forward.1} parent=15 // pred_check_branch
          %249 = sbr.rel (%p247) target = $region20
        $region19: #{attn_encoder_forward.1} parent=15 // pred_region
          %s250 = smul.u32 %s24, 2
          %s251 = ssub.s32 0, %s250
          %s252 = smul.u32 %s23, %s251
          %s253 = sadd.s32 %s24, %s252
          %s254 = smul.u32 8, %s253
          %p255 = scmp.lt.s32.totalorder %s254, 7
          %s256 = scalar_select %p255, %s254, 7
          %s257 = smul.addr %s256, 8
          %s258 = scalar_lea.vmem %s0, %s257
          %s259 = smul.u32 %s24, 2
          %s260 = ssub.s32 0, %s259
          %s261 = smul.u32 %s23, %s260
          %s262 = sadd.s32 %s24, %s261
          %s263 = smul.u32 8, %s262
        $region20: #{attn_encoder_forward.1} parent=15 // pred_fallthru
          _
        // Predicated region
        $region21: #{attn_encoder_forward.1} parent=15 // pred_check
          %p264 = pneg %p82
        $region22: #{attn_encoder_forward.1} parent=15 // pred_check_branch
          %266 = sbr.rel (%p264) target = $region24
        $region23: #{attn_encoder_forward.1} parent=15 // pred_region
          %p267 = scmp.lt.s32.totalorder %s23, 1
          %s268 = scalar_select %p267, %s23, 1
          %s269 = smul.addr %s268, 6
          %s270 = smul.addr %s269, 8
          %s271 = scalar_lea.vmem %s1, %s270
        $region24: #{attn_encoder_forward.1} parent=15 // pred_fallthru
          _
        // Predicated region
        $region25: #{attn_encoder_forward.1} parent=15 // pred_check
          %p272 = pneg %p108
        $region26: #{attn_encoder_forward.1} parent=15 // pred_check_branch
          %274 = sbr.rel (%p272) target = $region28
        $region27: #{attn_encoder_forward.1} parent=15 // pred_region
          %p275 = scmp.lt.s32.totalorder %s23, 1
          %s276 = scalar_select %p275, %s23, 1
          %s277 = smul.addr %s276, 3
          %s278 = scalar_lea.vmem %s2, %s277
        $region28: #{attn_encoder_forward.1} parent=15 // pred_fallthru
          _
        // Predicated region
        $region29: #{attn_encoder_forward.1} parent=15 // pred_check
          %p279 = pneg %p134
        $region30: #{attn_encoder_forward.1} parent=15 // pred_check_branch
          %281 = sbr.rel (%p279) target = $region32
        $region31: #{attn_encoder_forward.1} parent=15 // pred_region
          %s282 = sand.u32 %s124, 1
          %s283 = scalar_lea.sflag [#allocation5], %s282
          %s284 = sand.u32 %s124, 1
          %s285 = smul.addr %s284, 384
          %s286 = scalar_lea.vmem [#allocation4], %s285
          %288 = vsyncadd %s283, 0
          %s289 = smul.addr %s23, 48
          %s290 = smul.addr %s289, 8
          %s291 = scalar_lea.hbm %s3, %s290
          %s292 = sshll.u32 %s291, 4
          %s293 = int_to_ptr.hbm [resolvable:$true] %s292
          %s294 = sshll.u32 %s286, 4
          %s295 = int_to_ptr.vmem [resolvable:$true] %s294
          %300 = dma.hbm_to_vmem [thread:$0]  %s293, 6144, %s295, %s283, 384, 384, 24
        $region32: #{attn_encoder_forward.1} parent=15 // pred_fallthru
          _
        // Predicated region
        $region33: #{attn_encoder_forward.1} parent=15 // pred_check
          %p301 = pneg %p160
        $region34: #{attn_encoder_forward.1} parent=15 // pred_check_branch
          %303 = sbr.rel (%p301) target = $region36
        $region35: #{attn_encoder_forward.1} parent=15 // pred_region
          %p304 = scmp.lt.s32.totalorder %s23, 1
          %s305 = scalar_select %p304, %s23, 1
          %s306 = smul.addr %s305, 3
          %s307 = scalar_lea.vmem %s4, %s306
        $region36: #{attn_encoder_forward.1} parent=15 // pred_fallthru
          _
      $region16: #{attn_encoder_forward.1} parent=5 // pred_fallthru
        _
      %p308 = scmp.le.s32.totalorder 1, %s16
      %p309 = scmp.lt.s32.totalorder %s16, 3
      %p310 = pnand %p308, %p309
      %p311 = pneg %p310
      // Predicated region
      $region37: #{attn_encoder_forward.1} parent=5 // pred_check
        _
      $region38: #{attn_encoder_forward.1} parent=5 // pred_check_branch
        %313 = sbr.rel (%p310) target = $region40
      $region39: #{attn_encoder_forward.1} parent=5 // pred_region
        %s314 = ssub.s32 %s16, 1
        %s315 = sand.u32 %s127, 1
        %s316 = scalar_lea.sflag [#allocation5], %s315
        %s317 = sand.u32 %s127, 1
        %s318 = smul.addr %s317, 384
        %s319 = scalar_lea.vmem [#allocation4], %s318
        // Predicated region
        $region41: #{attn_encoder_forward.1} parent=39 // pred_check
          %p320 = pneg %p140
        $region42: #{attn_encoder_forward.1} parent=39 // pred_check_branch
          %322 = sbr.rel (%p320) target = $region44
        $region43: #{attn_encoder_forward.1} parent=39 // pred_region
          %324 = dma.done %s316, 6144
        $region44: #{attn_encoder_forward.1} parent=39 // pred_fallthru
          _
        %s325 = smul.u32 %s26, 2
        %s326 = ssub.s32 0, %s325
        %s327 = smul.u32 %s25, %s326
        %s328 = sadd.s32 %s26, %s327
        %s329 = smul.u32 8, %s328
        %p330 = scmp.lt.s32.totalorder %s329, 7
        %s331 = scalar_select %p330, %s329, 7
        %s332 = smul.addr %s331, 8
        %s333 = scalar_lea.vmem %s0, %s332
        %p334 = pneg %p62
        %p335 = pneg %p59
        %p336 = scmp.lt.s32.totalorder %s25, 1
        %s337 = scalar_select %p336, %s25, 1
        %s338 = smul.addr %s337, 6
        %s339 = smul.addr %s338, 8
        %s340 = scalar_lea.vmem %s1, %s339
        %p341 = pneg %p88
        %p342 = pneg %p85
        %p343 = scmp.lt.s32.totalorder %s25, 1
        %s344 = scalar_select %p343, %s25, 1
        %s345 = smul.addr %s344, 3
        %s346 = scalar_lea.vmem %s2, %s345
        %p347 = pneg %p114
        %p348 = pneg %p111
        %s349 = sand.u32 %s127, 1
        %s350 = scalar_lea.sflag [#allocation5], %s349
        %s351 = sand.u32 %s127, 1
        %s352 = smul.addr %s351, 384
        %s353 = scalar_lea.vmem [#allocation4], %s352
        %p354 = pneg %p140
        %p355 = pneg %p137
        %p356 = scmp.lt.s32.totalorder %s25, 1
        %s357 = scalar_select %p356, %s25, 1
        %s358 = smul.addr %s357, 3
        %s359 = scalar_lea.vmem %s4, %s358
        %p360 = pneg %p166
        %p361 = pneg %p163
        %p362 = pneg %p202
        %p363 = pneg %p199
        %s364 = sand.u32 %s189, 1
        %s365 = sand.u32 %s189, 1
        %s366 = smul.addr %s365, 64
        %s367 = scalar_lea.vmem [#allocation6], %s366
        %p368 = pneg %p228
        %p369 = pneg %p225
        %p370 = scmp.lt.s32.totalorder %s25, 1
        %s371 = scalar_select %p370, %s25, 1
        %s372 = smul.addr %s371, 8
        %s373 = scalar_lea.vmem %s6, %s372
        %s374 = smul.u32 %s26, 2
        %s375 = ssub.s32 0, %s374
        %s376 = smul.u32 %s25, %s375
        %s377 = sadd.s32 %s26, %s376
        %s378 = smul.u32 8, %s377
        %p379 = scmp.lt.s32.totalorder %s378, 7
        %s380 = scalar_select %p379, %s378, 7
        %s381 = smul.addr %s380, 8
        %s382 = scalar_lea.vmem %s0, %s381
        %s383 = smul.u32 %s26, 2
        %s384 = ssub.s32 0, %s383
        %s385 = smul.u32 %s25, %s384
        %s386 = sadd.s32 %s26, %s385
        %s387 = smul.u32 8, %s386
        %p388 = scmp.lt.s32.totalorder %s25, 1
        %s389 = scalar_select %p388, %s25, 1
        %s390 = smul.addr %s389, 6
        %s391 = smul.addr %s390, 8
        %s392 = scalar_lea.vmem %s1, %s391
        %p393 = scmp.lt.s32.totalorder %s25, 1
        %s394 = scalar_select %p393, %s25, 1
        %s395 = smul.addr %s394, 3
        %s396 = scalar_lea.vmem %s2, %s395
        %p397 = scmp.lt.s32.totalorder %s25, 1
        %s398 = scalar_select %p397, %s25, 1
        %s399 = smul.addr %s398, 3
        %s400 = scalar_lea.vmem %s4, %s399
        %s401 = smul.u32 %s26, 2
        %s402 = ssub.s32 0, %s401
        %s403 = smul.u32 %s25, %s402
        %s404 = sadd.s32 %s26, %s403
        %s405 = smul.u32 8, %s404
        %p406 = scmp.lt.s32.totalorder %s25, 1
        %s407 = scalar_select %p406, %s25, 1
        %s408 = smul.addr %s407, 8
        %s409 = scalar_lea.vmem %s6, %s408
        %p410 = scmp.eq.s32.totalorder %s26, 0
        // Predicated region
        $region45: #{attn_encoder_forward.1} parent=39 // pred_check
          %p411 = pneg %p410
        $region46: #{attn_encoder_forward.1} parent=39 // pred_check_branch
          %413 = sbr.rel (%p411) target = $region48
        $region47: #{attn_encoder_forward.1} parent=39 // pred_region
          %414 = vst [vmem:[#allocation2] sm:$0xff] 0.0
        $region48: #{attn_encoder_forward.1} parent=39 // pred_fallthru
          _
        %v415 = vld [vmem:[%s382] sm:$0xff]
        %v416 = vld [vmem:[%s382 + $0x8] sm:$0xff]
        %v417 = vld [vmem:[%s382 + $0x10] sm:$0xff]
        %v418 = vld [vmem:[%s382 + $0x18] sm:$0xff]
        %v419 = vld [vmem:[%s382 + $0x20] sm:$0xff]
        %v420 = vld [vmem:[%s382 + $0x28] sm:$0xff]
        %v421 = vld [vmem:[%s382 + $0x30] sm:$0xff]
        %v422 = vld [vmem:[%s382 + $0x38] sm:$0xff]
        %v423 = vld [vmem:[%s392] sm:$0xff]
        %v424 = vld [vmem:[%s392 + $0x8] sm:$0xff]
        %v425 = vld [vmem:[%s392 + $0x10] sm:$0xff]
        %v426 = vld [vmem:[%s392 + $0x18] sm:$0xff]
        %v427 = vld [vmem:[%s392 + $0x20] sm:$0xff]
        %v428 = vld [vmem:[%s392 + $0x28] sm:$0xff]
        %v429 = vld [vmem:[%s396] sm:$0x7]
        %v431 = vperm.slane %v429, 0
        %v432 = vperm.slane %v429, 1
        %v433 = vperm.slane %v429, 2
        %vm437 = vcmask 130048
        %v439 = vsel %vm437, %v415, 0
        %v442 = vsel %vm437, %v416, 0
        %v445 = vsel %vm437, %v417, 0
        %v448 = vsel %vm437, %v418, 0
        %v451 = vsel %vm437, %v419, 0
        %v454 = vsel %vm437, %v420, 0
        %v457 = vsel %vm437, %v421, 0
        %v460 = vsel %vm437, %v422, 0
        %462 = vmatpush.msra.mxu0 0.0
        %463 = vmatpush.msra.mxu0 0.0
        %464 = vmatpush.msra.mxu0 0.0
        %465 = vmatpush.msra.mxu0 0.0
        %466 = vmatpush.msra.mxu0 0.0
        %467 = vmatpush.msra.mxu0 0.0
        %468 = vmatpush.msra.mxu0 0.0
        %469 = vmatpush.msra.mxu0 0.0
        %470 = vmatpush.msra.mxu0 0.0
        %471 = vmatpush.msra.mxu0 0.0
        %472 = vmatpush.msra.mxu0 0.0
        %473 = vmatpush.msra.mxu0 0.0
        %474 = vmatpush.msra.mxu0 0.0
        %475 = vmatpush.msra.mxu0 0.0
        %476 = vmatpush.msra.mxu0 %v426
        %477 = vmatpush.msra.mxu0 %v423
        %478 = vmatmul.f32.gmra.mxu0 %v439
        %v479 = vpop.f32.mrf.mxu0
        %v480 = vadd.f32 %v431, %v479
        %481 = vmatmul.f32.gmra.mxu0 %v442
        %v482 = vpop.f32.mrf.mxu0
        %v483 = vadd.f32 %v431, %v482
        %484 = vmatmul.f32.gmra.mxu0 %v445
        %v485 = vpop.f32.mrf.mxu0
        %v486 = vadd.f32 %v431, %v485
        %487 = vmatmul.f32.gmra.mxu0 %v448
        %v488 = vpop.f32.mrf.mxu0
        %v489 = vadd.f32 %v431, %v488
        %490 = vmatmul.f32.gmra.mxu0 %v451
        %v491 = vpop.f32.mrf.mxu0
        %v492 = vadd.f32 %v431, %v491
        %493 = vmatmul.f32.gmra.mxu0 %v454
        %v494 = vpop.f32.mrf.mxu0
        %v495 = vadd.f32 %v431, %v494
        %496 = vmatmul.f32.gmra.mxu0 %v457
        %v497 = vpop.f32.mrf.mxu0
        %v498 = vadd.f32 %v431, %v497
        %499 = vmatmul.f32.gmra.mxu0 %v460
        %v500 = vpop.f32.mrf.mxu0
        %v501 = vadd.f32 %v431, %v500
        %502 = vdwg.mxu0
        %503 = vmatpush.msra.mxu0 0.0
        %504 = vmatpush.msra.mxu0 0.0
        %505 = vmatpush.msra.mxu0 0.0
        %506 = vmatpush.msra.mxu0 0.0
        %507 = vmatpush.msra.mxu0 0.0
        %508 = vmatpush.msra.mxu0 0.0
        %509 = vmatpush.msra.mxu0 0.0
        %510 = vmatpush.msra.mxu0 0.0
        %511 = vmatpush.msra.mxu0 0.0
        %512 = vmatpush.msra.mxu0 0.0
        %513 = vmatpush.msra.mxu0 0.0
        %514 = vmatpush.msra.mxu0 0.0
        %515 = vmatpush.msra.mxu0 0.0
        %516 = vmatpush.msra.mxu0 0.0
        %517 = vmatpush.msra.mxu0 %v427
        %518 = vmatpush.msra.mxu0 %v424
        %519 = vmatmul.f32.gmra.mxu0 %v439
        %v520 = vpop.f32.mrf.mxu0
        %v521 = vadd.f32 %v432, %v520
        %522 = vmatmul.f32.gmra.mxu0 %v442
        %v523 = vpop.f32.mrf.mxu0
        %v524 = vadd.f32 %v432, %v523
        %525 = vmatmul.f32.gmra.mxu0 %v445
        %v526 = vpop.f32.mrf.mxu0
        %v527 = vadd.f32 %v432, %v526
        %528 = vmatmul.f32.gmra.mxu0 %v448
        %v529 = vpop.f32.mrf.mxu0
        %v530 = vadd.f32 %v432, %v529
        %531 = vmatmul.f32.gmra.mxu0 %v451
        %v532 = vpop.f32.mrf.mxu0
        %v533 = vadd.f32 %v432, %v532
        %534 = vmatmul.f32.gmra.mxu0 %v454
        %v535 = vpop.f32.mrf.mxu0
        %v536 = vadd.f32 %v432, %v535
        %537 = vmatmul.f32.gmra.mxu0 %v457
        %v538 = vpop.f32.mrf.mxu0
        %v539 = vadd.f32 %v432, %v538
        %540 = vmatmul.f32.gmra.mxu0 %v460
        %v541 = vpop.f32.mrf.mxu0
        %v542 = vadd.f32 %v432, %v541
        %543 = vdwg.mxu0
        %544 = vmatpush.msra.mxu0 0.0
        %545 = vmatpush.msra.mxu0 0.0
        %546 = vmatpush.msra.mxu0 0.0
        %547 = vmatpush.msra.mxu0 0.0
        %548 = vmatpush.msra.mxu0 0.0
        %549 = vmatpush.msra.mxu0 0.0
        %550 = vmatpush.msra.mxu0 0.0
        %551 = vmatpush.msra.mxu0 0.0
        %552 = vmatpush.msra.mxu0 0.0
        %553 = vmatpush.msra.mxu0 0.0
        %554 = vmatpush.msra.mxu0 0.0
        %555 = vmatpush.msra.mxu0 0.0
        %556 = vmatpush.msra.mxu0 0.0
        %557 = vmatpush.msra.mxu0 0.0
        %558 = vmatpush.msra.mxu0 %v428
        %559 = vmatpush.msra.mxu0 %v425
        %560 = vmatmul.f32.gmra.mxu0 %v439
        %v561 = vpop.f32.mrf.mxu0
        %v562 = vadd.f32 %v433, %v561
        %563 = vmatmul.f32.gmra.mxu0 %v442
        %v564 = vpop.f32.mrf.mxu0
        %v565 = vadd.f32 %v433, %v564
        %566 = vmatmul.f32.gmra.mxu0 %v445
        %v567 = vpop.f32.mrf.mxu0
        %v568 = vadd.f32 %v433, %v567
        %569 = vmatmul.f32.gmra.mxu0 %v448
        %v570 = vpop.f32.mrf.mxu0
        %v571 = vadd.f32 %v433, %v570
        %572 = vmatmul.f32.gmra.mxu0 %v451
        %v573 = vpop.f32.mrf.mxu0
        %v574 = vadd.f32 %v433, %v573
        %575 = vmatmul.f32.gmra.mxu0 %v454
        %v576 = vpop.f32.mrf.mxu0
        %v577 = vadd.f32 %v433, %v576
        %578 = vmatmul.f32.gmra.mxu0 %v457
        %v579 = vpop.f32.mrf.mxu0
        %v580 = vadd.f32 %v433, %v579
        %581 = vmatmul.f32.gmra.mxu0 %v460
        %v582 = vpop.f32.mrf.mxu0
        %v583 = vadd.f32 %v433, %v582
        %584 = vdwg.mxu0
        %585 = vst [vmem:[#allocation3] sm:$0xff] %v480
        %586 = vst [vmem:[#allocation3 + $0x8] sm:$0xff] %v521
        %587 = vst [vmem:[#allocation3 + $0x10] sm:$0xff] %v562
        %588 = vst [vmem:[#allocation3 + $0x18] sm:$0xff] %v483
        %589 = vst [vmem:[#allocation3 + $0x20] sm:$0xff] %v524
        %590 = vst [vmem:[#allocation3 + $0x28] sm:$0xff] %v565
        %591 = vst [vmem:[#allocation3 + $0x30] sm:$0xff] %v486
        %592 = vst [vmem:[#allocation3 + $0x38] sm:$0xff] %v527
        %593 = vst [vmem:[#allocation3 + $0x40] sm:$0xff] %v568
        %594 = vst [vmem:[#allocation3 + $0x48] sm:$0xff] %v489
        %595 = vst [vmem:[#allocation3 + $0x50] sm:$0xff] %v530
        %596 = vst [vmem:[#allocation3 + $0x58] sm:$0xff] %v571
        %597 = vst [vmem:[#allocation3 + $0x60] sm:$0xff] %v492
        %598 = vst [vmem:[#allocation3 + $0x68] sm:$0xff] %v533
        %599 = vst [vmem:[#allocation3 + $0x70] sm:$0xff] %v574
        %600 = vst [vmem:[#allocation3 + $0x78] sm:$0xff] %v495
        %601 = vst [vmem:[#allocation3 + $0x80] sm:$0xff] %v536
        %602 = vst [vmem:[#allocation3 + $0x88] sm:$0xff] %v577
        %603 = vst [vmem:[#allocation3 + $0x90] sm:$0xff] %v498
        %604 = vst [vmem:[#allocation3 + $0x98] sm:$0xff] %v539
        %605 = vst [vmem:[#allocation3 + $0xa0] sm:$0xff] %v580
        %606 = vst [vmem:[#allocation3 + $0xa8] sm:$0xff] %v501
        %607 = vst [vmem:[#allocation3 + $0xb0] sm:$0xff] %v542
        %608 = vst [vmem:[#allocation3 + $0xb8] sm:$0xff] %v583
        %v609 = vld [vmem:[%s319] sm:$0xff]
        %v610 = vld [vmem:[%s319 + $0x8] sm:$0xff]
        %v611 = vld [vmem:[%s319 + $0x10] sm:$0xff]
        %v612 = vld [vmem:[%s319 + $0x18] sm:$0xff]
        %v613 = vld [vmem:[%s319 + $0x20] sm:$0xff]
        %v614 = vld [vmem:[%s319 + $0x28] sm:$0xff]
        %v615 = vld [vmem:[%s319 + $0x30] sm:$0xff]
        %v616 = vld [vmem:[%s319 + $0x38] sm:$0xff]
        %v617 = vld [vmem:[%s319 + $0x40] sm:$0xff]
        %v618 = vld [vmem:[%s319 + $0x48] sm:$0xff]
        %v619 = vld [vmem:[%s319 + $0x50] sm:$0xff]
        %v620 = vld [vmem:[%s319 + $0x58] sm:$0xff]
        %v621 = vld [vmem:[%s319 + $0x60] sm:$0xff]
        %v622 = vld [vmem:[%s319 + $0x68] sm:$0xff]
        %v623 = vld [vmem:[%s319 + $0x70] sm:$0xff]
        %v624 = vld [vmem:[%s319 + $0x78] sm:$0xff]
        %v625 = vld [vmem:[%s319 + $0x80] sm:$0xff]
        %v626 = vld [vmem:[%s319 + $0x88] sm:$0xff]
        %v627 = vld [vmem:[%s319 + $0x90] sm:$0xff]
        %v628 = vld [vmem:[%s319 + $0x98] sm:$0xff]
        %v629 = vld [vmem:[%s319 + $0xa0] sm:$0xff]
        %v630 = vld [vmem:[%s319 + $0xa8] sm:$0xff]
        %v631 = vld [vmem:[%s319 + $0xb0] sm:$0xff]
        %v632 = vld [vmem:[%s319 + $0xb8] sm:$0xff]
        %v633 = vld [vmem:[%s319 + $0xc0] sm:$0xff]
        %v634 = vld [vmem:[%s319 + $0xc8] sm:$0xff]
        %v635 = vld [vmem:[%s319 + $0xd0] sm:$0xff]
        %v636 = vld [vmem:[%s319 + $0xd8] sm:$0xff]
        %v637 = vld [vmem:[%s319 + $0xe0] sm:$0xff]
        %v638 = vld [vmem:[%s319 + $0xe8] sm:$0xff]
        %v639 = vld [vmem:[%s319 + $0xf0] sm:$0xff]
        %v640 = vld [vmem:[%s319 + $0xf8] sm:$0xff]
        %v641 = vld [vmem:[%s319 + $0x100] sm:$0xff]
        %v642 = vld [vmem:[%s319 + $0x108] sm:$0xff]
        %v643 = vld [vmem:[%s319 + $0x110] sm:$0xff]
        %v644 = vld [vmem:[%s319 + $0x118] sm:$0xff]
        %v645 = vld [vmem:[%s319 + $0x120] sm:$0xff]
        %v646 = vld [vmem:[%s319 + $0x128] sm:$0xff]
        %v647 = vld [vmem:[%s319 + $0x130] sm:$0xff]
        %v648 = vld [vmem:[%s319 + $0x138] sm:$0xff]
        %v649 = vld [vmem:[%s319 + $0x140] sm:$0xff]
        %v650 = vld [vmem:[%s319 + $0x148] sm:$0xff]
        %v651 = vld [vmem:[%s319 + $0x150] sm:$0xff]
        %v652 = vld [vmem:[%s319 + $0x158] sm:$0xff]
        %v653 = vld [vmem:[%s319 + $0x160] sm:$0xff]
        %v654 = vld [vmem:[%s319 + $0x168] sm:$0xff]
        %v655 = vld [vmem:[%s319 + $0x170] sm:$0xff]
        %v656 = vld [vmem:[%s319 + $0x178] sm:$0xff]
        %v657 = vld [vmem:[%s400] sm:$0x7]
        %v659 = vperm.slane %v657, 0
        %v660 = vperm.slane %v657, 1
        %v661 = vperm.slane %v657, 2
        %v665 = vld [vmem:[#allocation2] sm:$0xff]
        %s666 = smul.u32 %s25, 56
        %s667 = sshra.s32 %s666, 3
        %s668 = sand.u32 %s666, 7
        %s669 = smul.u32 %s667, 3
        %s670 = smul.addr %s669, 8
        %s671 = scalar_lea.vmem [#allocation3], %s670
        %v672 = vld [vmem:[%s671] sm:$0xff]
        %v673 = vld [vmem:[%s671 + $0x8] sm:$0xff]
        %v674 = vld [vmem:[%s671 + $0x10] sm:$0xff]
        %675 = vmatpush.msra.mxu0 %v654
        %676 = vmatpush.msra.mxu0 %v651
        %677 = vmatpush.msra.mxu0 %v648
        %678 = vmatpush.msra.mxu0 %v645
        %679 = vmatpush.msra.mxu0 %v642
        %680 = vmatpush.msra.mxu0 %v639
        %681 = vmatpush.msra.mxu0 %v636
        %682 = vmatpush.msra.mxu0 %v633
        %683 = vmatpush.msra.mxu0 %v630
        %684 = vmatpush.msra.mxu0 %v627
        %685 = vmatpush.msra.mxu0 %v624
        %686 = vmatpush.msra.mxu0 %v621
        %687 = vmatpush.msra.mxu0 %v618
        %688 = vmatpush.msra.mxu0 %v615
        %689 = vmatpush.msra.mxu0 %v612
        %690 = vmatpush.msra.mxu0 %v609
        %691 = vmatmul.f32.gmra.mxu0 %v665
        %v692 = vpop.f32.mrf.mxu0
        %v693 = vadd.f32 %v659, %v692
        %694 = vdwg.mxu0
        %695 = vmatpush.msra.mxu0 %v655
        %696 = vmatpush.msra.mxu0 %v652
        %697 = vmatpush.msra.mxu0 %v649
        %698 = vmatpush.msra.mxu0 %v646
        %699 = vmatpush.msra.mxu0 %v643
        %700 = vmatpush.msra.mxu0 %v640
        %701 = vmatpush.msra.mxu0 %v637
        %702 = vmatpush.msra.mxu0 %v634
        %703 = vmatpush.msra.mxu0 %v631
        %704 = vmatpush.msra.mxu0 %v628
        %705 = vmatpush.msra.mxu0 %v625
        %706 = vmatpush.msra.mxu0 %v622
        %707 = vmatpush.msra.mxu0 %v619
        %708 = vmatpush.msra.mxu0 %v616
        %709 = vmatpush.msra.mxu0 %v613
        %710 = vmatpush.msra.mxu0 %v610
        %711 = vmatmul.f32.gmra.mxu0 %v665
        %v712 = vpop.f32.mrf.mxu0
        %v713 = vadd.f32 %v660, %v712
        %714 = vdwg.mxu0
        %715 = vmatpush.msra.mxu0 %v656
        %716 = vmatpush.msra.mxu0 %v653
        %717 = vmatpush.msra.mxu0 %v650
        %718 = vmatpush.msra.mxu0 %v647
        %719 = vmatpush.msra.mxu0 %v644
        %720 = vmatpush.msra.mxu0 %v641
        %721 = vmatpush.msra.mxu0 %v638
        %722 = vmatpush.msra.mxu0 %v635
        %723 = vmatpush.msra.mxu0 %v632
        %724 = vmatpush.msra.mxu0 %v629
        %725 = vmatpush.msra.mxu0 %v626
        %726 = vmatpush.msra.mxu0 %v623
        %727 = vmatpush.msra.mxu0 %v620
        %728 = vmatpush.msra.mxu0 %v617
        %729 = vmatpush.msra.mxu0 %v614
        %730 = vmatpush.msra.mxu0 %v611
        %731 = vmatmul.f32.gmra.mxu0 %v665
        %v732 = vpop.f32.mrf.mxu0
        %v733 = vadd.f32 %v661, %v732
        %734 = vdwg.mxu0
        %v735 = vadd.f32 %v672, %v693
        %v736 = vxor.u32 %v735, 2147483648
        %v737 = vmul.f32 %v736, 1.442695
        %v738 = vpow.pop %v737
        %v739 = vadd.f32 %v738, 1.0
        %v740 = vrcp.pop %v739
        %v741 = vmul.f32 %v739, %v740
        %v742 = vsub.f32 1.0, %v741
        %v743 = vmul.f32 %v740, %v742
        %v744 = vadd.f32 %v740, %v743
        %vm745 = vweird.f32 %v739
        %vm746 = vweird.f32 %v740
        %vm747 = vmor %vm745, %vm746
        %v748 = vsel %vm747, %v740, %v744
        %v749 = vand.u32 2147483647, %v739
        %vm750 = vcmp.eq.f32.partialorder %v749, 8.507059e+37
        %v751 = vand.u32 %v739, 2147483648
        %v752 = vor.u32 1.1754944e-38, %v751
        %v753 = vsel %vm750, %v752, %v748
        %v754 = vmul.f32 1.0, %v753
        %v755 = vadd.f32 %v673, %v713
        %v756 = vxor.u32 %v755, 2147483648
        %v757 = vmul.f32 %v756, 1.442695
        %v758 = vpow.pop %v757
        %v759 = vadd.f32 %v758, 1.0
        %v760 = vrcp.pop %v759
        %v761 = vmul.f32 %v759, %v760
        %v762 = vsub.f32 1.0, %v761
        %v763 = vmul.f32 %v760, %v762
        %v764 = vadd.f32 %v760, %v763
        %vm765 = vweird.f32 %v759
        %vm766 = vweird.f32 %v760
        %vm767 = vmor %vm765, %vm766
        %v768 = vsel %vm767, %v760, %v764
        %v769 = vand.u32 2147483647, %v759
        %vm770 = vcmp.eq.f32.partialorder %v769, 8.507059e+37
        %v771 = vand.u32 %v759, 2147483648
        %v772 = vor.u32 1.1754944e-38, %v771
        %v773 = vsel %vm770, %v772, %v768
        %v774 = vmul.f32 1.0, %v773
        %v775 = vmul.f32 %v754, %v733
        %v776 = vadd.f32 %v674, %v775
        %v777 = vtanh.pop %v776
        %v778 = vsub.f32 1.0, %v774
        %v779 = vmul.f32 %v778, %v777
        %v780 = vmul.f32 %v774, %v665
        %v781 = vadd.f32 %v779, %v780
        %s782 = scalar_lea.vmem %s367, %s666 [#allocation6]
        %783 = vst [vmem:[%s782] sm:$0xff] %v781
        %s784 = smul.u32 %s25, 5
        %s785 = sadd.s32 %s784, 1
        %s786 = smul.u32 %s785, 8
        %s787 = sshra.s32 %s786, 3
        %s788 = sand.u32 %s786, 7
        %s789 = smul.u32 %s787, 3
        %s790 = smul.addr %s789, 8
        %s791 = scalar_lea.vmem [#allocation3], %s790
        %v792 = vld [vmem:[%s791] sm:$0xff]
        %v793 = vld [vmem:[%s791 + $0x8] sm:$0xff]
        %v794 = vld [vmem:[%s791 + $0x10] sm:$0xff]
        %795 = vmatpush.msra.mxu0 %v654
        %796 = vmatpush.msra.mxu0 %v651
        %797 = vmatpush.msra.mxu0 %v648
        %798 = vmatpush.msra.mxu0 %v645
        %799 = vmatpush.msra.mxu0 %v642
        %800 = vmatpush.msra.mxu0 %v639
        %801 = vmatpush.msra.mxu0 %v636
        %802 = vmatpush.msra.mxu0 %v633
        %803 = vmatpush.msra.mxu0 %v630
        %804 = vmatpush.msra.mxu0 %v627
        %805 = vmatpush.msra.mxu0 %v624
        %806 = vmatpush.msra.mxu0 %v621
        %807 = vmatpush.msra.mxu0 %v618
        %808 = vmatpush.msra.mxu0 %v615
        %809 = vmatpush.msra.mxu0 %v612
        %810 = vmatpush.msra.mxu0 %v609
        %811 = vmatmul.f32.gmra.mxu0 %v781
        %v812 = vpop.f32.mrf.mxu0
        %v813 = vadd.f32 %v659, %v812
        %814 = vdwg.mxu0
        %815 = vmatpush.msra.mxu0 %v655
        %816 = vmatpush.msra.mxu0 %v652
        %817 = vmatpush.msra.mxu0 %v649
        %818 = vmatpush.msra.mxu0 %v646
        %819 = vmatpush.msra.mxu0 %v643
        %820 = vmatpush.msra.mxu0 %v640
        %821 = vmatpush.msra.mxu0 %v637
        %822 = vmatpush.msra.mxu0 %v634
        %823 = vmatpush.msra.mxu0 %v631
        %824 = vmatpush.msra.mxu0 %v628
        %825 = vmatpush.msra.mxu0 %v625
        %826 = vmatpush.msra.mxu0 %v622
        %827 = vmatpush.msra.mxu0 %v619
        %828 = vmatpush.msra.mxu0 %v616
        %829 = vmatpush.msra.mxu0 %v613
        %830 = vmatpush.msra.mxu0 %v610
        %831 = vmatmul.f32.gmra.mxu0 %v781
        %v832 = vpop.f32.mrf.mxu0
        %v833 = vadd.f32 %v660, %v832
        %834 = vdwg.mxu0
        %835 = vmatpush.msra.mxu0 %v656
        %836 = vmatpush.msra.mxu0 %v653
        %837 = vmatpush.msra.mxu0 %v650
        %838 = vmatpush.msra.mxu0 %v647
        %839 = vmatpush.msra.mxu0 %v644
        %840 = vmatpush.msra.mxu0 %v641
        %841 = vmatpush.msra.mxu0 %v638
        %842 = vmatpush.msra.mxu0 %v635
        %843 = vmatpush.msra.mxu0 %v632
        %844 = vmatpush.msra.mxu0 %v629
        %845 = vmatpush.msra.mxu0 %v626
        %846 = vmatpush.msra.mxu0 %v623
        %847 = vmatpush.msra.mxu0 %v620
        %848 = vmatpush.msra.mxu0 %v617
        %849 = vmatpush.msra.mxu0 %v614
        %850 = vmatpush.msra.mxu0 %v611
        %851 = vmatmul.f32.gmra.mxu0 %v781
        %v852 = vpop.f32.mrf.mxu0
        %v853 = vadd.f32 %v661, %v852
        %854 = vdwg.mxu0
        %v855 = vadd.f32 %v792, %v813
        %v856 = vxor.u32 %v855, 2147483648
        %v857 = vmul.f32 %v856, 1.442695
        %v858 = vpow.pop %v857
        %v859 = vadd.f32 %v858, 1.0
        %v860 = vrcp.pop %v859
        %v861 = vmul.f32 %v859, %v860
        %v862 = vsub.f32 1.0, %v861
        %v863 = vmul.f32 %v860, %v862
        %v864 = vadd.f32 %v860, %v863
        %vm865 = vweird.f32 %v859
        %vm866 = vweird.f32 %v860
        %vm867 = vmor %vm865, %vm866
        %v868 = vsel %vm867, %v860, %v864
        %v869 = vand.u32 2147483647, %v859
        %vm870 = vcmp.eq.f32.partialorder %v869, 8.507059e+37
        %v871 = vand.u32 %v859, 2147483648
        %v872 = vor.u32 1.1754944e-38, %v871
        %v873 = vsel %vm870, %v872, %v868
        %v874 = vmul.f32 1.0, %v873
        %v875 = vadd.f32 %v793, %v833
        %v876 = vxor.u32 %v875, 2147483648
        %v877 = vmul.f32 %v876, 1.442695
        %v878 = vpow.pop %v877
        %v879 = vadd.f32 %v878, 1.0
        %v880 = vrcp.pop %v879
        %v881 = vmul.f32 %v879, %v880
        %v882 = vsub.f32 1.0, %v881
        %v883 = vmul.f32 %v880, %v882
        %v884 = vadd.f32 %v880, %v883
        %vm885 = vweird.f32 %v879
        %vm886 = vweird.f32 %v880
        %vm887 = vmor %vm885, %vm886
        %v888 = vsel %vm887, %v880, %v884
        %v889 = vand.u32 2147483647, %v879
        %vm890 = vcmp.eq.f32.partialorder %v889, 8.507059e+37
        %v891 = vand.u32 %v879, 2147483648
        %v892 = vor.u32 1.1754944e-38, %v891
        %v893 = vsel %vm890, %v892, %v888
        %v894 = vmul.f32 1.0, %v893
        %v895 = vmul.f32 %v874, %v853
        %v896 = vadd.f32 %v794, %v895
        %v897 = vtanh.pop %v896
        %v898 = vsub.f32 1.0, %v894
        %v899 = vmul.f32 %v898, %v897
        %v900 = vmul.f32 %v894, %v781
        %v901 = vadd.f32 %v899, %v900
        %s902 = scalar_lea.vmem %s367, %s786 [#allocation6]
        %903 = vst [vmem:[%s902] sm:$0xff] %v901
        %s904 = smul.u32 %s25, 3
        %s905 = sadd.s32 %s904, 2
        %s906 = smul.u32 %s905, 8
        %s907 = sshra.s32 %s906, 3
        %s908 = sand.u32 %s906, 7
        %s909 = smul.u32 %s907, 3
        %s910 = smul.addr %s909, 8
        %s911 = scalar_lea.vmem [#allocation3], %s910
        %v912 = vld [vmem:[%s911] sm:$0xff]
        %v913 = vld [vmem:[%s911 + $0x8] sm:$0xff]
        %v914 = vld [vmem:[%s911 + $0x10] sm:$0xff]
        %915 = vmatpush.msra.mxu0 %v654
        %916 = vmatpush.msra.mxu0 %v651
        %917 = vmatpush.msra.mxu0 %v648
        %918 = vmatpush.msra.mxu0 %v645
        %919 = vmatpush.msra.mxu0 %v642
        %920 = vmatpush.msra.mxu0 %v639
        %921 = vmatpush.msra.mxu0 %v636
        %922 = vmatpush.msra.mxu0 %v633
        %923 = vmatpush.msra.mxu0 %v630
        %924 = vmatpush.msra.mxu0 %v627
        %925 = vmatpush.msra.mxu0 %v624
        %926 = vmatpush.msra.mxu0 %v621
        %927 = vmatpush.msra.mxu0 %v618
        %928 = vmatpush.msra.mxu0 %v615
        %929 = vmatpush.msra.mxu0 %v612
        %930 = vmatpush.msra.mxu0 %v609
        %931 = vmatmul.f32.gmra.mxu0 %v901
        %v932 = vpop.f32.mrf.mxu0
        %v933 = vadd.f32 %v659, %v932
        %934 = vdwg.mxu0
        %935 = vmatpush.msra.mxu0 %v655
        %936 = vmatpush.msra.mxu0 %v652
        %937 = vmatpush.msra.mxu0 %v649
        %938 = vmatpush.msra.mxu0 %v646
        %939 = vmatpush.msra.mxu0 %v643
        %940 = vmatpush.msra.mxu0 %v640
        %941 = vmatpush.msra.mxu0 %v637
        %942 = vmatpush.msra.mxu0 %v634
        %943 = vmatpush.msra.mxu0 %v631
        %944 = vmatpush.msra.mxu0 %v628
        %945 = vmatpush.msra.mxu0 %v625
        %946 = vmatpush.msra.mxu0 %v622
        %947 = vmatpush.msra.mxu0 %v619
        %948 = vmatpush.msra.mxu0 %v616
        %949 = vmatpush.msra.mxu0 %v613
        %950 = vmatpush.msra.mxu0 %v610
        %951 = vmatmul.f32.gmra.mxu0 %v901
        %v952 = vpop.f32.mrf.mxu0
        %v953 = vadd.f32 %v660, %v952
        %954 = vdwg.mxu0
        %955 = vmatpush.msra.mxu0 %v656
        %956 = vmatpush.msra.mxu0 %v653
        %957 = vmatpush.msra.mxu0 %v650
        %958 = vmatpush.msra.mxu0 %v647
        %959 = vmatpush.msra.mxu0 %v644
        %960 = vmatpush.msra.mxu0 %v641
        %961 = vmatpush.msra.mxu0 %v638
        %962 = vmatpush.msra.mxu0 %v635
        %963 = vmatpush.msra.mxu0 %v632
        %964 = vmatpush.msra.mxu0 %v629
        %965 = vmatpush.msra.mxu0 %v626
        %966 = vmatpush.msra.mxu0 %v623
        %967 = vmatpush.msra.mxu0 %v620
        %968 = vmatpush.msra.mxu0 %v617
        %969 = vmatpush.msra.mxu0 %v614
        %970 = vmatpush.msra.mxu0 %v611
        %971 = vmatmul.f32.gmra.mxu0 %v901
        %v972 = vpop.f32.mrf.mxu0
        %v973 = vadd.f32 %v661, %v972
        %974 = vdwg.mxu0
        %v975 = vadd.f32 %v912, %v933
        %v976 = vxor.u32 %v975, 2147483648
        %v977 = vmul.f32 %v976, 1.442695
        %v978 = vpow.pop %v977
        %v979 = vadd.f32 %v978, 1.0
        %v980 = vrcp.pop %v979
        %v981 = vmul.f32 %v979, %v980
        %v982 = vsub.f32 1.0, %v981
        %v983 = vmul.f32 %v980, %v982
        %v984 = vadd.f32 %v980, %v983
        %vm985 = vweird.f32 %v979
        %vm986 = vweird.f32 %v980
        %vm987 = vmor %vm985, %vm986
        %v988 = vsel %vm987, %v980, %v984
        %v989 = vand.u32 2147483647, %v979
        %vm990 = vcmp.eq.f32.partialorder %v989, 8.507059e+37
        %v991 = vand.u32 %v979, 2147483648
        %v992 = vor.u32 1.1754944e-38, %v991
        %v993 = vsel %vm990, %v992, %v988
        %v994 = vmul.f32 1.0, %v993
        %v995 = vadd.f32 %v913, %v953
        %v996 = vxor.u32 %v995, 2147483648
        %v997 = vmul.f32 %v996, 1.442695
        %v998 = vpow.pop %v997
        %v999 = vadd.f32 %v998, 1.0
        %v1000 = vrcp.pop %v999
        %v1001 = vmul.f32 %v999, %v1000
        %v1002 = vsub.f32 1.0, %v1001
        %v1003 = vmul.f32 %v1000, %v1002
        %v1004 = vadd.f32 %v1000, %v1003
        %vm1005 = vweird.f32 %v999
        %vm1006 = vweird.f32 %v1000
        %vm1007 = vmor %vm1005, %vm1006
        %v1008 = vsel %vm1007, %v1000, %v1004
        %v1009 = vand.u32 2147483647, %v999
        %vm1010 = vcmp.eq.f32.partialorder %v1009, 8.507059e+37
        %v1011 = vand.u32 %v999, 2147483648
        %v1012 = vor.u32 1.1754944e-38, %v1011
        %v1013 = vsel %vm1010, %v1012, %v1008
        %v1014 = vmul.f32 1.0, %v1013
        %v1015 = vmul.f32 %v994, %v973
        %v1016 = vadd.f32 %v914, %v1015
        %v1017 = vtanh.pop %v1016
        %v1018 = vsub.f32 1.0, %v1014
        %v1019 = vmul.f32 %v1018, %v1017
        %v1020 = vmul.f32 %v1014, %v901
        %v1021 = vadd.f32 %v1019, %v1020
        %s1022 = scalar_lea.vmem %s367, %s906 [#allocation6]
        %1023 = vst [vmem:[%s1022] sm:$0xff] %v1021
        %s1024 = sadd.s32 %s25, 3
        %s1025 = smul.u32 %s1024, 8
        %s1026 = sshra.s32 %s1025, 3
        %s1027 = sand.u32 %s1025, 7
        %s1028 = smul.u32 %s1026, 3
        %s1029 = smul.addr %s1028, 8
        %s1030 = scalar_lea.vmem [#allocation3], %s1029
        %v1031 = vld [vmem:[%s1030] sm:$0xff]
        %v1032 = vld [vmem:[%s1030 + $0x8] sm:$0xff]
        %v1033 = vld [vmem:[%s1030 + $0x10] sm:$0xff]
        %1034 = vmatpush.msra.mxu0 %v654
        %1035 = vmatpush.msra.mxu0 %v651
        %1036 = vmatpush.msra.mxu0 %v648
        %1037 = vmatpush.msra.mxu0 %v645
        %1038 = vmatpush.msra.mxu0 %v642
        %1039 = vmatpush.msra.mxu0 %v639
        %1040 = vmatpush.msra.mxu0 %v636
        %1041 = vmatpush.msra.mxu0 %v633
        %1042 = vmatpush.msra.mxu0 %v630
        %1043 = vmatpush.msra.mxu0 %v627
        %1044 = vmatpush.msra.mxu0 %v624
        %1045 = vmatpush.msra.mxu0 %v621
        %1046 = vmatpush.msra.mxu0 %v618
        %1047 = vmatpush.msra.mxu0 %v615
        %1048 = vmatpush.msra.mxu0 %v612
        %1049 = vmatpush.msra.mxu0 %v609
        %1050 = vmatmul.f32.gmra.mxu0 %v1021
        %v1051 = vpop.f32.mrf.mxu0
        %v1052 = vadd.f32 %v659, %v1051
        %1053 = vdwg.mxu0
        %1054 = vmatpush.msra.mxu0 %v655
        %1055 = vmatpush.msra.mxu0 %v652
        %1056 = vmatpush.msra.mxu0 %v649
        %1057 = vmatpush.msra.mxu0 %v646
        %1058 = vmatpush.msra.mxu0 %v643
        %1059 = vmatpush.msra.mxu0 %v640
        %1060 = vmatpush.msra.mxu0 %v637
        %1061 = vmatpush.msra.mxu0 %v634
        %1062 = vmatpush.msra.mxu0 %v631
        %1063 = vmatpush.msra.mxu0 %v628
        %1064 = vmatpush.msra.mxu0 %v625
        %1065 = vmatpush.msra.mxu0 %v622
        %1066 = vmatpush.msra.mxu0 %v619
        %1067 = vmatpush.msra.mxu0 %v616
        %1068 = vmatpush.msra.mxu0 %v613
        %1069 = vmatpush.msra.mxu0 %v610
        %1070 = vmatmul.f32.gmra.mxu0 %v1021
        %v1071 = vpop.f32.mrf.mxu0
        %v1072 = vadd.f32 %v660, %v1071
        %1073 = vdwg.mxu0
        %1074 = vmatpush.msra.mxu0 %v656
        %1075 = vmatpush.msra.mxu0 %v653
        %1076 = vmatpush.msra.mxu0 %v650
        %1077 = vmatpush.msra.mxu0 %v647
        %1078 = vmatpush.msra.mxu0 %v644
        %1079 = vmatpush.msra.mxu0 %v641
        %1080 = vmatpush.msra.mxu0 %v638
        %1081 = vmatpush.msra.mxu0 %v635
        %1082 = vmatpush.msra.mxu0 %v632
        %1083 = vmatpush.msra.mxu0 %v629
        %1084 = vmatpush.msra.mxu0 %v626
        %1085 = vmatpush.msra.mxu0 %v623
        %1086 = vmatpush.msra.mxu0 %v620
        %1087 = vmatpush.msra.mxu0 %v617
        %1088 = vmatpush.msra.mxu0 %v614
        %1089 = vmatpush.msra.mxu0 %v611
        %1090 = vmatmul.f32.gmra.mxu0 %v1021
        %v1091 = vpop.f32.mrf.mxu0
        %v1092 = vadd.f32 %v661, %v1091
        %1093 = vdwg.mxu0
        %v1094 = vadd.f32 %v1031, %v1052
        %v1095 = vxor.u32 %v1094, 2147483648
        %v1096 = vmul.f32 %v1095, 1.442695
        %v1097 = vpow.pop %v1096
        %v1098 = vadd.f32 %v1097, 1.0
        %v1099 = vrcp.pop %v1098
        %v1100 = vmul.f32 %v1098, %v1099
        %v1101 = vsub.f32 1.0, %v1100
        %v1102 = vmul.f32 %v1099, %v1101
        %v1103 = vadd.f32 %v1099, %v1102
        %vm1104 = vweird.f32 %v1098
        %vm1105 = vweird.f32 %v1099
        %vm1106 = vmor %vm1104, %vm1105
        %v1107 = vsel %vm1106, %v1099, %v1103
        %v1108 = vand.u32 2147483647, %v1098
        %vm1109 = vcmp.eq.f32.partialorder %v1108, 8.507059e+37
        %v1110 = vand.u32 %v1098, 2147483648
        %v1111 = vor.u32 1.1754944e-38, %v1110
        %v1112 = vsel %vm1109, %v1111, %v1107
        %v1113 = vmul.f32 1.0, %v1112
        %v1114 = vadd.f32 %v1032, %v1072
        %v1115 = vxor.u32 %v1114, 2147483648
        %v1116 = vmul.f32 %v1115, 1.442695
        %v1117 = vpow.pop %v1116
        %v1118 = vadd.f32 %v1117, 1.0
        %v1119 = vrcp.pop %v1118
        %v1120 = vmul.f32 %v1118, %v1119
        %v1121 = vsub.f32 1.0, %v1120
        %v1122 = vmul.f32 %v1119, %v1121
        %v1123 = vadd.f32 %v1119, %v1122
        %vm1124 = vweird.f32 %v1118
        %vm1125 = vweird.f32 %v1119
        %vm1126 = vmor %vm1124, %vm1125
        %v1127 = vsel %vm1126, %v1119, %v1123
        %v1128 = vand.u32 2147483647, %v1118
        %vm1129 = vcmp.eq.f32.partialorder %v1128, 8.507059e+37
        %v1130 = vand.u32 %v1118, 2147483648
        %v1131 = vor.u32 1.1754944e-38, %v1130
        %v1132 = vsel %vm1129, %v1131, %v1127
        %v1133 = vmul.f32 1.0, %v1132
        %v1134 = vmul.f32 %v1113, %v1092
        %v1135 = vadd.f32 %v1033, %v1134
        %v1136 = vtanh.pop %v1135
        %v1137 = vsub.f32 1.0, %v1133
        %v1138 = vmul.f32 %v1137, %v1136
        %v1139 = vmul.f32 %v1133, %v1021
        %v1140 = vadd.f32 %v1138, %v1139
        %s1141 = scalar_lea.vmem %s367, %s1025 [#allocation6]
        %1142 = vst [vmem:[%s1141] sm:$0xff] %v1140
        %s1143 = ssub.s32 4, %s25
        %s1144 = smul.u32 %s1143, 8
        %s1145 = sshra.s32 %s1144, 3
        %s1146 = sand.u32 %s1144, 7
        %s1147 = smul.u32 %s1145, 3
        %s1148 = smul.addr %s1147, 8
        %s1149 = scalar_lea.vmem [#allocation3], %s1148
        %v1150 = vld [vmem:[%s1149] sm:$0xff]
        %v1151 = vld [vmem:[%s1149 + $0x8] sm:$0xff]
        %v1152 = vld [vmem:[%s1149 + $0x10] sm:$0xff]
        %1153 = vmatpush.msra.mxu0 %v654
        %1154 = vmatpush.msra.mxu0 %v651
        %1155 = vmatpush.msra.mxu0 %v648
        %1156 = vmatpush.msra.mxu0 %v645
        %1157 = vmatpush.msra.mxu0 %v642
        %1158 = vmatpush.msra.mxu0 %v639
        %1159 = vmatpush.msra.mxu0 %v636
        %1160 = vmatpush.msra.mxu0 %v633
        %1161 = vmatpush.msra.mxu0 %v630
        %1162 = vmatpush.msra.mxu0 %v627
        %1163 = vmatpush.msra.mxu0 %v624
        %1164 = vmatpush.msra.mxu0 %v621
        %1165 = vmatpush.msra.mxu0 %v618
        %1166 = vmatpush.msra.mxu0 %v615
        %1167 = vmatpush.msra.mxu0 %v612
        %1168 = vmatpush.msra.mxu0 %v609
        %1169 = vmatmul.f32.gmra.mxu0 %v1140
        %v1170 = vpop.f32.mrf.mxu0
        %v1171 = vadd.f32 %v659, %v1170
        %1172 = vdwg.mxu0
        %1173 = vmatpush.msra.mxu0 %v655
        %1174 = vmatpush.msra.mxu0 %v652
        %1175 = vmatpush.msra.mxu0 %v649
        %1176 = vmatpush.msra.mxu0 %v646
        %1177 = vmatpush.msra.mxu0 %v643
        %1178 = vmatpush.msra.mxu0 %v640
        %1179 = vmatpush.msra.mxu0 %v637
        %1180 = vmatpush.msra.mxu0 %v634
        %1181 = vmatpush.msra.mxu0 %v631
        %1182 = vmatpush.msra.mxu0 %v628
        %1183 = vmatpush.msra.mxu0 %v625
        %1184 = vmatpush.msra.mxu0 %v622
        %1185 = vmatpush.msra.mxu0 %v619
        %1186 = vmatpush.msra.mxu0 %v616
        %1187 = vmatpush.msra.mxu0 %v613
        %1188 = vmatpush.msra.mxu0 %v610
        %1189 = vmatmul.f32.gmra.mxu0 %v1140
        %v1190 = vpop.f32.mrf.mxu0
        %v1191 = vadd.f32 %v660, %v1190
        %1192 = vdwg.mxu0
        %1193 = vmatpush.msra.mxu0 %v656
        %1194 = vmatpush.msra.mxu0 %v653
        %1195 = vmatpush.msra.mxu0 %v650
        %1196 = vmatpush.msra.mxu0 %v647
        %1197 = vmatpush.msra.mxu0 %v644
        %1198 = vmatpush.msra.mxu0 %v641
        %1199 = vmatpush.msra.mxu0 %v638
        %1200 = vmatpush.msra.mxu0 %v635
        %1201 = vmatpush.msra.mxu0 %v632
        %1202 = vmatpush.msra.mxu0 %v629
        %1203 = vmatpush.msra.mxu0 %v626
        %1204 = vmatpush.msra.mxu0 %v623
        %1205 = vmatpush.msra.mxu0 %v620
        %1206 = vmatpush.msra.mxu0 %v617
        %1207 = vmatpush.msra.mxu0 %v614
        %1208 = vmatpush.msra.mxu0 %v611
        %1209 = vmatmul.f32.gmra.mxu0 %v1140
        %v1210 = vpop.f32.mrf.mxu0
        %v1211 = vadd.f32 %v661, %v1210
        %1212 = vdwg.mxu0
        %v1213 = vadd.f32 %v1150, %v1171
        %v1214 = vxor.u32 %v1213, 2147483648
        %v1215 = vmul.f32 %v1214, 1.442695
        %v1216 = vpow.pop %v1215
        %v1217 = vadd.f32 %v1216, 1.0
        %v1218 = vrcp.pop %v1217
        %v1219 = vmul.f32 %v1217, %v1218
        %v1220 = vsub.f32 1.0, %v1219
        %v1221 = vmul.f32 %v1218, %v1220
        %v1222 = vadd.f32 %v1218, %v1221
        %vm1223 = vweird.f32 %v1217
        %vm1224 = vweird.f32 %v1218
        %vm1225 = vmor %vm1223, %vm1224
        %v1226 = vsel %vm1225, %v1218, %v1222
        %v1227 = vand.u32 2147483647, %v1217
        %vm1228 = vcmp.eq.f32.partialorder %v1227, 8.507059e+37
        %v1229 = vand.u32 %v1217, 2147483648
        %v1230 = vor.u32 1.1754944e-38, %v1229
        %v1231 = vsel %vm1228, %v1230, %v1226
        %v1232 = vmul.f32 1.0, %v1231
        %v1233 = vadd.f32 %v1151, %v1191
        %v1234 = vxor.u32 %v1233, 2147483648
        %v1235 = vmul.f32 %v1234, 1.442695
        %v1236 = vpow.pop %v1235
        %v1237 = vadd.f32 %v1236, 1.0
        %v1238 = vrcp.pop %v1237
        %v1239 = vmul.f32 %v1237, %v1238
        %v1240 = vsub.f32 1.0, %v1239
        %v1241 = vmul.f32 %v1238, %v1240
        %v1242 = vadd.f32 %v1238, %v1241
        %vm1243 = vweird.f32 %v1237
        %vm1244 = vweird.f32 %v1238
        %vm1245 = vmor %vm1243, %vm1244
        %v1246 = vsel %vm1245, %v1238, %v1242
        %v1247 = vand.u32 2147483647, %v1237
        %vm1248 = vcmp.eq.f32.partialorder %v1247, 8.507059e+37
        %v1249 = vand.u32 %v1237, 2147483648
        %v1250 = vor.u32 1.1754944e-38, %v1249
        %v1251 = vsel %vm1248, %v1250, %v1246
        %v1252 = vmul.f32 1.0, %v1251
        %v1253 = vmul.f32 %v1232, %v1211
        %v1254 = vadd.f32 %v1152, %v1253
        %v1255 = vtanh.pop %v1254
        %v1256 = vsub.f32 1.0, %v1252
        %v1257 = vmul.f32 %v1256, %v1255
        %v1258 = vmul.f32 %v1252, %v1140
        %v1259 = vadd.f32 %v1257, %v1258
        %s1260 = scalar_lea.vmem %s367, %s1144 [#allocation6]
        %1261 = vst [vmem:[%s1260] sm:$0xff] %v1259
        %s1262 = smul.u32 %s25, 4294967293
        %s1263 = sadd.s32 %s1262, 5
        %s1264 = smul.u32 %s1263, 8
        %s1265 = sshra.s32 %s1264, 3
        %s1266 = sand.u32 %s1264, 7
        %s1267 = smul.u32 %s1265, 3
        %s1268 = smul.addr %s1267, 8
        %s1269 = scalar_lea.vmem [#allocation3], %s1268
        %v1270 = vld [vmem:[%s1269] sm:$0xff]
        %v1271 = vld [vmem:[%s1269 + $0x8] sm:$0xff]
        %v1272 = vld [vmem:[%s1269 + $0x10] sm:$0xff]
        %1273 = vmatpush.msra.mxu0 %v654
        %1274 = vmatpush.msra.mxu0 %v651
        %1275 = vmatpush.msra.mxu0 %v648
        %1276 = vmatpush.msra.mxu0 %v645
        %1277 = vmatpush.msra.mxu0 %v642
        %1278 = vmatpush.msra.mxu0 %v639
        %1279 = vmatpush.msra.mxu0 %v636
        %1280 = vmatpush.msra.mxu0 %v633
        %1281 = vmatpush.msra.mxu0 %v630
        %1282 = vmatpush.msra.mxu0 %v627
        %1283 = vmatpush.msra.mxu0 %v624
        %1284 = vmatpush.msra.mxu0 %v621
        %1285 = vmatpush.msra.mxu0 %v618
        %1286 = vmatpush.msra.mxu0 %v615
        %1287 = vmatpush.msra.mxu0 %v612
        %1288 = vmatpush.msra.mxu0 %v609
        %1289 = vmatmul.f32.gmra.mxu0 %v1259
        %v1290 = vpop.f32.mrf.mxu0
        %v1291 = vadd.f32 %v659, %v1290
        %1292 = vdwg.mxu0
        %1293 = vmatpush.msra.mxu0 %v655
        %1294 = vmatpush.msra.mxu0 %v652
        %1295 = vmatpush.msra.mxu0 %v649
        %1296 = vmatpush.msra.mxu0 %v646
        %1297 = vmatpush.msra.mxu0 %v643
        %1298 = vmatpush.msra.mxu0 %v640
        %1299 = vmatpush.msra.mxu0 %v637
        %1300 = vmatpush.msra.mxu0 %v634
        %1301 = vmatpush.msra.mxu0 %v631
        %1302 = vmatpush.msra.mxu0 %v628
        %1303 = vmatpush.msra.mxu0 %v625
        %1304 = vmatpush.msra.mxu0 %v622
        %1305 = vmatpush.msra.mxu0 %v619
        %1306 = vmatpush.msra.mxu0 %v616
        %1307 = vmatpush.msra.mxu0 %v613
        %1308 = vmatpush.msra.mxu0 %v610
        %1309 = vmatmul.f32.gmra.mxu0 %v1259
        %v1310 = vpop.f32.mrf.mxu0
        %v1311 = vadd.f32 %v660, %v1310
        %1312 = vdwg.mxu0
        %1313 = vmatpush.msra.mxu0 %v656
        %1314 = vmatpush.msra.mxu0 %v653
        %1315 = vmatpush.msra.mxu0 %v650
        %1316 = vmatpush.msra.mxu0 %v647
        %1317 = vmatpush.msra.mxu0 %v644
        %1318 = vmatpush.msra.mxu0 %v641
        %1319 = vmatpush.msra.mxu0 %v638
        %1320 = vmatpush.msra.mxu0 %v635
        %1321 = vmatpush.msra.mxu0 %v632
        %1322 = vmatpush.msra.mxu0 %v629
        %1323 = vmatpush.msra.mxu0 %v626
        %1324 = vmatpush.msra.mxu0 %v623
        %1325 = vmatpush.msra.mxu0 %v620
        %1326 = vmatpush.msra.mxu0 %v617
        %1327 = vmatpush.msra.mxu0 %v614
        %1328 = vmatpush.msra.mxu0 %v611
        %1329 = vmatmul.f32.gmra.mxu0 %v1259
        %v1330 = vpop.f32.mrf.mxu0
        %v1331 = vadd.f32 %v661, %v1330
        %1332 = vdwg.mxu0
        %v1333 = vadd.f32 %v1270, %v1291
        %v1334 = vxor.u32 %v1333, 2147483648
        %v1335 = vmul.f32 %v1334, 1.442695
        %v1336 = vpow.pop %v1335
        %v1337 = vadd.f32 %v1336, 1.0
        %v1338 = vrcp.pop %v1337
        %v1339 = vmul.f32 %v1337, %v1338
        %v1340 = vsub.f32 1.0, %v1339
        %v1341 = vmul.f32 %v1338, %v1340
        %v1342 = vadd.f32 %v1338, %v1341
        %vm1343 = vweird.f32 %v1337
        %vm1344 = vweird.f32 %v1338
        %vm1345 = vmor %vm1343, %vm1344
        %v1346 = vsel %vm1345, %v1338, %v1342
        %v1347 = vand.u32 2147483647, %v1337
        %vm1348 = vcmp.eq.f32.partialorder %v1347, 8.507059e+37
        %v1349 = vand.u32 %v1337, 2147483648
        %v1350 = vor.u32 1.1754944e-38, %v1349
        %v1351 = vsel %vm1348, %v1350, %v1346
        %v1352 = vmul.f32 1.0, %v1351
        %v1353 = vadd.f32 %v1271, %v1311
        %v1354 = vxor.u32 %v1353, 2147483648
        %v1355 = vmul.f32 %v1354, 1.442695
        %v1356 = vpow.pop %v1355
        %v1357 = vadd.f32 %v1356, 1.0
        %v1358 = vrcp.pop %v1357
        %v1359 = vmul.f32 %v1357, %v1358
        %v1360 = vsub.f32 1.0, %v1359
        %v1361 = vmul.f32 %v1358, %v1360
        %v1362 = vadd.f32 %v1358, %v1361
        %vm1363 = vweird.f32 %v1357
        %vm1364 = vweird.f32 %v1358
        %vm1365 = vmor %vm1363, %vm1364
        %v1366 = vsel %vm1365, %v1358, %v1362
        %v1367 = vand.u32 2147483647, %v1357
        %vm1368 = vcmp.eq.f32.partialorder %v1367, 8.507059e+37
        %v1369 = vand.u32 %v1357, 2147483648
        %v1370 = vor.u32 1.1754944e-38, %v1369
        %v1371 = vsel %vm1368, %v1370, %v1366
        %v1372 = vmul.f32 1.0, %v1371
        %v1373 = vmul.f32 %v1352, %v1331
        %v1374 = vadd.f32 %v1272, %v1373
        %v1375 = vtanh.pop %v1374
        %v1376 = vsub.f32 1.0, %v1372
        %v1377 = vmul.f32 %v1376, %v1375
        %v1378 = vmul.f32 %v1372, %v1259
        %v1379 = vadd.f32 %v1377, %v1378
        %s1380 = scalar_lea.vmem %s367, %s1264 [#allocation6]
        %1381 = vst [vmem:[%s1380] sm:$0xff] %v1379
        %s1382 = smul.u32 %s25, 4294967291
        %s1383 = sadd.s32 %s1382, 6
        %s1384 = smul.u32 %s1383, 8
        %s1385 = sshra.s32 %s1384, 3
        %s1386 = sand.u32 %s1384, 7
        %s1387 = smul.u32 %s1385, 3
        %s1388 = smul.addr %s1387, 8
        %s1389 = scalar_lea.vmem [#allocation3], %s1388
        %v1390 = vld [vmem:[%s1389] sm:$0xff]
        %v1391 = vld [vmem:[%s1389 + $0x8] sm:$0xff]
        %v1392 = vld [vmem:[%s1389 + $0x10] sm:$0xff]
        %1393 = vmatpush.msra.mxu0 %v654
        %1394 = vmatpush.msra.mxu0 %v651
        %1395 = vmatpush.msra.mxu0 %v648
        %1396 = vmatpush.msra.mxu0 %v645
        %1397 = vmatpush.msra.mxu0 %v642
        %1398 = vmatpush.msra.mxu0 %v639
        %1399 = vmatpush.msra.mxu0 %v636
        %1400 = vmatpush.msra.mxu0 %v633
        %1401 = vmatpush.msra.mxu0 %v630
        %1402 = vmatpush.msra.mxu0 %v627
        %1403 = vmatpush.msra.mxu0 %v624
        %1404 = vmatpush.msra.mxu0 %v621
        %1405 = vmatpush.msra.mxu0 %v618
        %1406 = vmatpush.msra.mxu0 %v615
        %1407 = vmatpush.msra.mxu0 %v612
        %1408 = vmatpush.msra.mxu0 %v609
        %1409 = vmatmul.f32.gmra.mxu0 %v1379
        %v1410 = vpop.f32.mrf.mxu0
        %v1411 = vadd.f32 %v659, %v1410
        %1412 = vdwg.mxu0
        %1413 = vmatpush.msra.mxu0 %v655
        %1414 = vmatpush.msra.mxu0 %v652
        %1415 = vmatpush.msra.mxu0 %v649
        %1416 = vmatpush.msra.mxu0 %v646
        %1417 = vmatpush.msra.mxu0 %v643
        %1418 = vmatpush.msra.mxu0 %v640
        %1419 = vmatpush.msra.mxu0 %v637
        %1420 = vmatpush.msra.mxu0 %v634
        %1421 = vmatpush.msra.mxu0 %v631
        %1422 = vmatpush.msra.mxu0 %v628
        %1423 = vmatpush.msra.mxu0 %v625
        %1424 = vmatpush.msra.mxu0 %v622
        %1425 = vmatpush.msra.mxu0 %v619
        %1426 = vmatpush.msra.mxu0 %v616
        %1427 = vmatpush.msra.mxu0 %v613
        %1428 = vmatpush.msra.mxu0 %v610
        %1429 = vmatmul.f32.gmra.mxu0 %v1379
        %v1430 = vpop.f32.mrf.mxu0
        %v1431 = vadd.f32 %v660, %v1430
        %1432 = vdwg.mxu0
        %1433 = vmatpush.msra.mxu0 %v656
        %1434 = vmatpush.msra.mxu0 %v653
        %1435 = vmatpush.msra.mxu0 %v650
        %1436 = vmatpush.msra.mxu0 %v647
        %1437 = vmatpush.msra.mxu0 %v644
        %1438 = vmatpush.msra.mxu0 %v641
        %1439 = vmatpush.msra.mxu0 %v638
        %1440 = vmatpush.msra.mxu0 %v635
        %1441 = vmatpush.msra.mxu0 %v632
        %1442 = vmatpush.msra.mxu0 %v629
        %1443 = vmatpush.msra.mxu0 %v626
        %1444 = vmatpush.msra.mxu0 %v623
        %1445 = vmatpush.msra.mxu0 %v620
        %1446 = vmatpush.msra.mxu0 %v617
        %1447 = vmatpush.msra.mxu0 %v614
        %1448 = vmatpush.msra.mxu0 %v611
        %1449 = vmatmul.f32.gmra.mxu0 %v1379
        %v1450 = vpop.f32.mrf.mxu0
        %v1451 = vadd.f32 %v661, %v1450
        %1452 = vdwg.mxu0
        %v1453 = vadd.f32 %v1390, %v1411
        %v1454 = vxor.u32 %v1453, 2147483648
        %v1455 = vmul.f32 %v1454, 1.442695
        %v1456 = vpow.pop %v1455
        %v1457 = vadd.f32 %v1456, 1.0
        %v1458 = vrcp.pop %v1457
        %v1459 = vmul.f32 %v1457, %v1458
        %v1460 = vsub.f32 1.0, %v1459
        %v1461 = vmul.f32 %v1458, %v1460
        %v1462 = vadd.f32 %v1458, %v1461
        %vm1463 = vweird.f32 %v1457
        %vm1464 = vweird.f32 %v1458
        %vm1465 = vmor %vm1463, %vm1464
        %v1466 = vsel %vm1465, %v1458, %v1462
        %v1467 = vand.u32 2147483647, %v1457
        %vm1468 = vcmp.eq.f32.partialorder %v1467, 8.507059e+37
        %v1469 = vand.u32 %v1457, 2147483648
        %v1470 = vor.u32 1.1754944e-38, %v1469
        %v1471 = vsel %vm1468, %v1470, %v1466
        %v1472 = vmul.f32 1.0, %v1471
        %v1473 = vadd.f32 %v1391, %v1431
        %v1474 = vxor.u32 %v1473, 2147483648
        %v1475 = vmul.f32 %v1474, 1.442695
        %v1476 = vpow.pop %v1475
        %v1477 = vadd.f32 %v1476, 1.0
        %v1478 = vrcp.pop %v1477
        %v1479 = vmul.f32 %v1477, %v1478
        %v1480 = vsub.f32 1.0, %v1479
        %v1481 = vmul.f32 %v1478, %v1480
        %v1482 = vadd.f32 %v1478, %v1481
        %vm1483 = vweird.f32 %v1477
        %vm1484 = vweird.f32 %v1478
        %vm1485 = vmor %vm1483, %vm1484
        %v1486 = vsel %vm1485, %v1478, %v1482
        %v1487 = vand.u32 2147483647, %v1477
        %vm1488 = vcmp.eq.f32.partialorder %v1487, 8.507059e+37
        %v1489 = vand.u32 %v1477, 2147483648
        %v1490 = vor.u32 1.1754944e-38, %v1489
        %v1491 = vsel %vm1488, %v1490, %v1486
        %v1492 = vmul.f32 1.0, %v1491
        %v1493 = vmul.f32 %v1472, %v1451
        %v1494 = vadd.f32 %v1392, %v1493
        %v1495 = vtanh.pop %v1494
        %v1496 = vsub.f32 1.0, %v1492
        %v1497 = vmul.f32 %v1496, %v1495
        %v1498 = vmul.f32 %v1492, %v1379
        %v1499 = vadd.f32 %v1497, %v1498
        %s1500 = scalar_lea.vmem %s367, %s1384 [#allocation6]
        %1501 = vst [vmem:[%s1500] sm:$0xff] %v1499
        %s1502 = smul.u32 %s25, 4294967289
        %s1503 = sadd.s32 %s1502, 7
        %s1504 = smul.u32 %s1503, 8
        %s1505 = sshra.s32 %s1504, 3
        %s1506 = sand.u32 %s1504, 7
        %s1507 = smul.u32 %s1505, 3
        %s1508 = smul.addr %s1507, 8
        %s1509 = scalar_lea.vmem [#allocation3], %s1508
        %v1510 = vld [vmem:[%s1509] sm:$0xff]
        %v1511 = vld [vmem:[%s1509 + $0x8] sm:$0xff]
        %v1512 = vld [vmem:[%s1509 + $0x10] sm:$0xff]
        %1513 = vmatpush.msra.mxu0 %v654
        %1514 = vmatpush.msra.mxu0 %v651
        %1515 = vmatpush.msra.mxu0 %v648
        %1516 = vmatpush.msra.mxu0 %v645
        %1517 = vmatpush.msra.mxu0 %v642
        %1518 = vmatpush.msra.mxu0 %v639
        %1519 = vmatpush.msra.mxu0 %v636
        %1520 = vmatpush.msra.mxu0 %v633
        %1521 = vmatpush.msra.mxu0 %v630
        %1522 = vmatpush.msra.mxu0 %v627
        %1523 = vmatpush.msra.mxu0 %v624
        %1524 = vmatpush.msra.mxu0 %v621
        %1525 = vmatpush.msra.mxu0 %v618
        %1526 = vmatpush.msra.mxu0 %v615
        %1527 = vmatpush.msra.mxu0 %v612
        %1528 = vmatpush.msra.mxu0 %v609
        %1529 = vmatmul.f32.gmra.mxu0 %v1499
        %v1530 = vpop.f32.mrf.mxu0
        %v1531 = vadd.f32 %v659, %v1530
        %1532 = vdwg.mxu0
        %1533 = vmatpush.msra.mxu0 %v655
        %1534 = vmatpush.msra.mxu0 %v652
        %1535 = vmatpush.msra.mxu0 %v649
        %1536 = vmatpush.msra.mxu0 %v646
        %1537 = vmatpush.msra.mxu0 %v643
        %1538 = vmatpush.msra.mxu0 %v640
        %1539 = vmatpush.msra.mxu0 %v637
        %1540 = vmatpush.msra.mxu0 %v634
        %1541 = vmatpush.msra.mxu0 %v631
        %1542 = vmatpush.msra.mxu0 %v628
        %1543 = vmatpush.msra.mxu0 %v625
        %1544 = vmatpush.msra.mxu0 %v622
        %1545 = vmatpush.msra.mxu0 %v619
        %1546 = vmatpush.msra.mxu0 %v616
        %1547 = vmatpush.msra.mxu0 %v613
        %1548 = vmatpush.msra.mxu0 %v610
        %1549 = vmatmul.f32.gmra.mxu0 %v1499
        %v1550 = vpop.f32.mrf.mxu0
        %v1551 = vadd.f32 %v660, %v1550
        %1552 = vdwg.mxu0
        %1553 = vmatpush.msra.mxu0 %v656
        %1554 = vmatpush.msra.mxu0 %v653
        %1555 = vmatpush.msra.mxu0 %v650
        %1556 = vmatpush.msra.mxu0 %v647
        %1557 = vmatpush.msra.mxu0 %v644
        %1558 = vmatpush.msra.mxu0 %v641
        %1559 = vmatpush.msra.mxu0 %v638
        %1560 = vmatpush.msra.mxu0 %v635
        %1561 = vmatpush.msra.mxu0 %v632
        %1562 = vmatpush.msra.mxu0 %v629
        %1563 = vmatpush.msra.mxu0 %v626
        %1564 = vmatpush.msra.mxu0 %v623
        %1565 = vmatpush.msra.mxu0 %v620
        %1566 = vmatpush.msra.mxu0 %v617
        %1567 = vmatpush.msra.mxu0 %v614
        %1568 = vmatpush.msra.mxu0 %v611
        %1569 = vmatmul.f32.gmra.mxu0 %v1499
        %v1570 = vpop.f32.mrf.mxu0
        %v1571 = vadd.f32 %v661, %v1570
        %1572 = vdwg.mxu0
        %v1573 = vadd.f32 %v1510, %v1531
        %v1574 = vxor.u32 %v1573, 2147483648
        %v1575 = vmul.f32 %v1574, 1.442695
        %v1576 = vpow.pop %v1575
        %v1577 = vadd.f32 %v1576, 1.0
        %v1578 = vrcp.pop %v1577
        %v1579 = vmul.f32 %v1577, %v1578
        %v1580 = vsub.f32 1.0, %v1579
        %v1581 = vmul.f32 %v1578, %v1580
        %v1582 = vadd.f32 %v1578, %v1581
        %vm1583 = vweird.f32 %v1577
        %vm1584 = vweird.f32 %v1578
        %vm1585 = vmor %vm1583, %vm1584
        %v1586 = vsel %vm1585, %v1578, %v1582
        %v1587 = vand.u32 2147483647, %v1577
        %vm1588 = vcmp.eq.f32.partialorder %v1587, 8.507059e+37
        %v1589 = vand.u32 %v1577, 2147483648
        %v1590 = vor.u32 1.1754944e-38, %v1589
        %v1591 = vsel %vm1588, %v1590, %v1586
        %v1592 = vmul.f32 1.0, %v1591
        %v1593 = vadd.f32 %v1511, %v1551
        %v1594 = vxor.u32 %v1593, 2147483648
        %v1595 = vmul.f32 %v1594, 1.442695
        %v1596 = vpow.pop %v1595
        %v1597 = vadd.f32 %v1596, 1.0
        %v1598 = vrcp.pop %v1597
        %v1599 = vmul.f32 %v1597, %v1598
        %v1600 = vsub.f32 1.0, %v1599
        %v1601 = vmul.f32 %v1598, %v1600
        %v1602 = vadd.f32 %v1598, %v1601
        %vm1603 = vweird.f32 %v1597
        %vm1604 = vweird.f32 %v1598
        %vm1605 = vmor %vm1603, %vm1604
        %v1606 = vsel %vm1605, %v1598, %v1602
        %v1607 = vand.u32 2147483647, %v1597
        %vm1608 = vcmp.eq.f32.partialorder %v1607, 8.507059e+37
        %v1609 = vand.u32 %v1597, 2147483648
        %v1610 = vor.u32 1.1754944e-38, %v1609
        %v1611 = vsel %vm1608, %v1610, %v1606
        %v1612 = vmul.f32 1.0, %v1611
        %v1613 = vmul.f32 %v1592, %v1571
        %v1614 = vadd.f32 %v1512, %v1613
        %v1615 = vtanh.pop %v1614
        %v1616 = vsub.f32 1.0, %v1612
        %v1617 = vmul.f32 %v1616, %v1615
        %v1618 = vmul.f32 %v1612, %v1499
        %v1619 = vadd.f32 %v1617, %v1618
        %s1620 = scalar_lea.vmem %s367, %s1504 [#allocation6]
        %1621 = vst [vmem:[%s1620] sm:$0xff] %v1619
        %1622 = vst [vmem:[#allocation2] sm:$0xff] %v1619
        %1623 = vst [vmem:[%s409] sm:$0xff] %v1619
        %s1624 = sand.u32 %s189, 1
        %s1625 = sand.u32 %s189, 1
        %s1626 = smul.addr %s1625, 64
        %s1627 = scalar_lea.vmem [#allocation6], %s1626
        %p1628 = scmp.lt.s32.totalorder %s25, 1
        %s1629 = scalar_select %p1628, %s25, 1
        %s1630 = smul.addr %s1629, 8
        %s1631 = scalar_lea.vmem %s6, %s1630
        // Predicated region
        $region49: #{attn_encoder_forward.1} parent=39 // pred_check
          %p1632 = pneg %p199
        $region50: #{attn_encoder_forward.1} parent=39 // pred_check_branch
          %1634 = sbr.rel (%p1632) target = $region52
        $region51: #{attn_encoder_forward.1} parent=39 // pred_region
          %s1635 = smul.u32 %s26, 2
          %s1636 = ssub.s32 0, %s1635
          %s1637 = smul.u32 %s25, %s1636
          %s1638 = sadd.s32 %s26, %s1637
          %s1639 = smul.u32 8, %s1638
          %s1640 = smul.addr %s1639, 2
          %s1641 = sadd.s32 %s25, %s1640
          %s1642 = smul.addr %s1641, 8
          %s1643 = scalar_lea.vmem %s5, %s1642
          // Predicated region
          $region53: #{attn_encoder_forward.1} parent=51 // pred_check
            _
          $region54: #{attn_encoder_forward.1} parent=51 // pred_check_branch
            %1645 = sbr.rel (0) target = $region56
          $region55: #{attn_encoder_forward.1} parent=51 // pred_region
            // Predicated region
            $region57: #{attn_encoder_forward.1} parent=55 // pred_check
              _
            $region58: #{attn_encoder_forward.1} parent=55 // pred_check_branch
              %1647 = sbr.rel (0) target = $region60
            $region59: #{attn_encoder_forward.1} parent=55 // pred_region
              // Predicated region
              $region72: #{attn_encoder_forward.1} parent=59 // pred_check
                _
              $region73: #{attn_encoder_forward.1} parent=59 // pred_check_branch
                %1677 = sbr.rel (0) target = $region75
              $region74: #{attn_encoder_forward.1} parent=59 // pred_region
                loop: start=0, step=1, limit=1
                $region76: #{attn_encoder_forward.1} parent=74 // loop_pre_header
                  _
                $region77: #{attn_encoder_forward.1} parent=74 // loop_header
                  %s1679 = sphi 0, %s1683
                  %p1680 = scmp.ge.s32.totalorder %s1679, 1
                  %s1684 = sphi %s1627, %s1627
                  %s1685 = sphi %s1643, %s1643
                $region78: #{attn_encoder_forward.1} parent=74 // loop_header_branch
                  %1682 = sbr.rel (%p1680) target = $region82
                $region79: #{attn_encoder_forward.1} parent=74 // loop_body
                  %v1686 = vld [vmem:[%s1684] sm:$0xff]
                  %1687 = vst [vmem:[%s1685] sm:$0xff] %v1686
                  %v1688 = vld [vmem:[%s1684 + $0x8] sm:$0xff]
                  %1689 = vst [vmem:[%s1685 + $0x10] sm:$0xff] %v1688
                  %v1690 = vld [vmem:[%s1684 + $0x10] sm:$0xff]
                  %1691 = vst [vmem:[%s1685 + $0x20] sm:$0xff] %v1690
                  %v1692 = vld [vmem:[%s1684 + $0x18] sm:$0xff]
                  %1693 = vst [vmem:[%s1685 + $0x30] sm:$0xff] %v1692
                  %v1694 = vld [vmem:[%s1684 + $0x20] sm:$0xff]
                  %1695 = vst [vmem:[%s1685 + $0x40] sm:$0xff] %v1694
                  %v1696 = vld [vmem:[%s1684 + $0x28] sm:$0xff]
                  %1697 = vst [vmem:[%s1685 + $0x50] sm:$0xff] %v1696
                  %v1698 = vld [vmem:[%s1684 + $0x30] sm:$0xff]
                  %1699 = vst [vmem:[%s1685 + $0x60] sm:$0xff] %v1698
                  %v1700 = vld [vmem:[%s1684 + $0x38] sm:$0xff]
                  %1701 = vst [vmem:[%s1685 + $0x70] sm:$0xff] %v1700
                $region80: #{attn_encoder_forward.1} parent=74 // loop_footer
                  %s1683 = sadd.s32 1, %s1679
                $region81: #{attn_encoder_forward.1} parent=74 // loop_footer_branch
                  %1678 = sbr.rel target = $region77
                $region82: #{attn_encoder_forward.1} parent=74 // loop_exit
                  _
              $region75: #{attn_encoder_forward.1} parent=59 // pred_fallthru
                _
              // Predicated region
              $region83: #{attn_encoder_forward.1} parent=59 // pred_check
                _
              $region84: #{attn_encoder_forward.1} parent=59 // pred_check_branch
                %1703 = sbr.rel target = $region86
              $region85: #{attn_encoder_forward.1} parent=59 // pred_region
                _
              $region86: #{attn_encoder_forward.1} parent=59 // pred_fallthru
                _
            $region60: #{attn_encoder_forward.1} parent=55 // pred_fallthru
              _
            // Predicated region
            $region61: #{attn_encoder_forward.1} parent=55 // pred_check
              _
            $region62: #{attn_encoder_forward.1} parent=55 // pred_check_branch
              %1649 = sbr.rel target = $region64
            $region63: #{attn_encoder_forward.1} parent=55 // pred_region
              %s1651 = ssub.s32 256, 1
              loop: start=0, step=1, limit=1
              $region65: #{attn_encoder_forward.1} parent=63 // loop_pre_header
                _
              $region66: #{attn_encoder_forward.1} parent=63 // loop_header
                %s1653 = sphi 0, %s1657
                %p1654 = scmp.ge.s32.totalorder %s1653, 1
                %s1658 = sphi %s1627, %s1627
                %s1659 = sphi %s1643, %s1643
              $region67: #{attn_encoder_forward.1} parent=63 // loop_header_branch
                %1656 = sbr.rel (%p1654) target = $region71
              $region68: #{attn_encoder_forward.1} parent=63 // loop_body
                %v1660 = vld [vmem:[%s1658] sm:%s1651]
                %1661 = vst [vmem:[%s1659] sm:%s1651] %v1660
                %v1662 = vld [vmem:[%s1658 + $0x8] sm:%s1651]
                %1663 = vst [vmem:[%s1659 + $0x10] sm:%s1651] %v1662
                %v1664 = vld [vmem:[%s1658 + $0x10] sm:%s1651]
                %1665 = vst [vmem:[%s1659 + $0x20] sm:%s1651] %v1664
                %v1666 = vld [vmem:[%s1658 + $0x18] sm:%s1651]
                %1667 = vst [vmem:[%s1659 + $0x30] sm:%s1651] %v1666
                %v1668 = vld [vmem:[%s1658 + $0x20] sm:%s1651]
                %1669 = vst [vmem:[%s1659 + $0x40] sm:%s1651] %v1668
                %v1670 = vld [vmem:[%s1658 + $0x28] sm:%s1651]
                %1671 = vst [vmem:[%s1659 + $0x50] sm:%s1651] %v1670
                %v1672 = vld [vmem:[%s1658 + $0x30] sm:%s1651]
                %1673 = vst [vmem:[%s1659 + $0x60] sm:%s1651] %v1672
                %v1674 = vld [vmem:[%s1658 + $0x38] sm:%s1651]
                %1675 = vst [vmem:[%s1659 + $0x70] sm:%s1651] %v1674
              $region69: #{attn_encoder_forward.1} parent=63 // loop_footer
                %s1657 = sadd.s32 1, %s1653
              $region70: #{attn_encoder_forward.1} parent=63 // loop_footer_branch
                %1652 = sbr.rel target = $region66
              $region71: #{attn_encoder_forward.1} parent=63 // loop_exit
                _
            $region64: #{attn_encoder_forward.1} parent=55 // pred_fallthru
              _
          $region56: #{attn_encoder_forward.1} parent=51 // pred_fallthru
            _
          %1704 = vnop
        $region52: #{attn_encoder_forward.1} parent=39 // pred_fallthru
          _
        // Predicated region
        $region87: #{attn_encoder_forward.1} parent=39 // pred_check
          %p1705 = pneg %p225
        $region88: #{attn_encoder_forward.1} parent=39 // pred_check_branch
          %1707 = sbr.rel (%p1705) target = $region90
        $region89: #{attn_encoder_forward.1} parent=39 // pred_region
          _
        $region90: #{attn_encoder_forward.1} parent=39 // pred_fallthru
          _
      $region40: #{attn_encoder_forward.1} parent=5 // pred_fallthru
        _
      %p1708 = scmp.le.s32.totalorder 2, %s16
      // Predicated region
      $region91: #{attn_encoder_forward.1} parent=5 // pred_check
        %p1709 = pneg %p1708
      $region92: #{attn_encoder_forward.1} parent=5 // pred_check_branch
        %1711 = sbr.rel (%p1709) target = $region94
      $region93: #{attn_encoder_forward.1} parent=5 // pred_region
        %s1712 = ssub.s32 %s16, 2
        // Predicated region
        $region95: #{attn_encoder_forward.1} parent=93 // pred_check
          %p1713 = pneg %p205
        $region96: #{attn_encoder_forward.1} parent=93 // pred_check_branch
          %1715 = sbr.rel (%p1713) target = $region98
        $region97: #{attn_encoder_forward.1} parent=93 // pred_region
          %s1716 = sand.u32 %s190, 1
          %s1717 = sand.u32 %s190, 1
          %s1718 = smul.addr %s1717, 64
          %s1719 = scalar_lea.vmem [#allocation6], %s1718
        $region98: #{attn_encoder_forward.1} parent=93 // pred_fallthru
          _
        // Predicated region
        $region99: #{attn_encoder_forward.1} parent=93 // pred_check
          %p1720 = pneg %p231
        $region100: #{attn_encoder_forward.1} parent=93 // pred_check_branch
          %1722 = sbr.rel (%p1720) target = $region102
        $region101: #{attn_encoder_forward.1} parent=93 // pred_region
          %p1723 = scmp.lt.s32.totalorder %s27, 1
          %s1724 = scalar_select %p1723, %s27, 1
          %s1725 = smul.addr %s1724, 8
          %s1726 = scalar_lea.vmem %s6, %s1725
        $region102: #{attn_encoder_forward.1} parent=93 // pred_fallthru
          _
      $region94: #{attn_encoder_forward.1} parent=5 // pred_fallthru
        _
    $region6: #{attn_encoder_forward.1} parent=1 // loop_footer
      %s20 = sadd.s32 1, %s16
    $region7: #{attn_encoder_forward.1} parent=1 // loop_footer_branch
      %15 = sbr.rel target = $region3
    $region8: #{attn_encoder_forward.1} parent=1 // loop_exit
      _
    %1727 = vsyncpa [#allocation5], 1
    %s1728 = scalar_lea.sflag [#allocation5], 1
    %1729 = vsyncpa %s1728, 1

</llo_original>
